<compile_context>
chip_gen: v7x
topology: tpu7x:2x2x1
jax: 0.10.0
libtpu: 0.0.40
codegen_flags: <defaults>
</compile_context>

<pallas_src>
import functools

import jax
import jax.numpy as jnp
from jax import lax
from jax.experimental import pallas as pl
from jax.experimental.pallas import tpu as pltpu


# -----------------------------------------------------------------------------
# Pallas kernel: one grid step per (batch_tile, time_chunk); hidden/cell state
# carried in VMEM scratch across the sequential ("arbitrary") time-chunk axis.
# -----------------------------------------------------------------------------
def _lstm_kernel(len_ref, h0_ref, c0_ref, xw_ref, whh_ref,
                 out_ref, hN_ref, cN_ref, h_sc, c_sc, *, hidden_size, t_chunk):
    tc = pl.program_id(1)                        # time-chunk index (sequential)
    H = hidden_size

    @pl.when(tc == 0)
    def _():
        h_sc[...] = h0_ref[...]
        c_sc[...] = c0_ref[...]

    lens = len_ref[...]                          # (BB, 1) int32, hoisted out of loop
    whh = whh_ref[...]                           # (H, 4H) matmul dtype (bf16), hoisted
    t_base = tc * t_chunk

    def step(s, carry):
        h, c = carry                             # f32 (BB, H)
        xw_t = xw_ref[s]                         # (BB, 4H) f32 = x_t @ W_ih + bias (precomputed)
        # Only the recurrent matmul remains inside the loop.
        gates = xw_t + jnp.dot(h.astype(whh.dtype), whh,
                               preferred_element_type=jnp.float32)
        i_g = jax.nn.sigmoid(gates[:, 0 * H:1 * H])
        f_g = jax.nn.sigmoid(gates[:, 1 * H:2 * H])
        g_g = jnp.tanh(gates[:, 2 * H:3 * H])
        o_g = jax.nn.sigmoid(gates[:, 3 * H:4 * H])
        c_new = f_g * c + i_g * g_g
        h_new = o_g * jnp.tanh(c_new)

        # pack_padded_sequence semantics: freeze state / zero output past lengths[b]
        mask = (t_base + s) < lens               # (BB, 1) bool
        out_ref[s] = jnp.where(mask, h_new, jnp.zeros_like(h_new)).astype(out_ref.dtype)
        return jnp.where(mask, h_new, h), jnp.where(mask, c_new, c)

    h, c = lax.fori_loop(0, t_chunk, step, (h_sc[...], c_sc[...]), unroll=True)
    h_sc[...] = h
    c_sc[...] = c

    # Write the final state only once, on the last time chunk.
    @pl.when(tc == pl.num_programs(1) - 1)
    def _():
        hN_ref[...] = h.astype(hN_ref.dtype)
        cN_ref[...] = c.astype(cN_ref.dtype)


def lstm_pallas(x, lengths, h0, c0, w_ih, w_hh, bias, *, t_chunk=16, use_bf16=True):
    """x: (B, T, D) batch-first. Returns (out (B, T, H), h_n (B, H), c_n (B, H))."""
    B, T, D = x.shape
    H = h0.shape[-1]
    mm_dtype = jnp.bfloat16 if use_bf16 else jnp.float32

    # ---- pad batch up to a multiple of 8 (sublane alignment); padded rows have
    #      length 0 -> zero outputs, frozen zero state; sliced off below. ----
    Bp = -(-B // 8) * 8
    pad_b = Bp - B
    if pad_b:
        x = jnp.pad(x, ((0, pad_b), (0, 0), (0, 0)))
        lengths = jnp.pad(lengths, (0, pad_b))
        h0 = jnp.pad(h0, ((0, pad_b), (0, 0)))
        c0 = jnp.pad(c0, ((0, pad_b), (0, 0)))

    # ---- pad time up to a multiple of the chunk size ----
    t_chunk = max(1, min(t_chunk, T))
    n_tc = pl.cdiv(T, t_chunk)
    Tp = n_tc * t_chunk
    pad_t = Tp - T

    # ---- hoist the input projection out of the recurrence: one big MXU matmul ----
    x_tm = jnp.swapaxes(x, 0, 1)                              # (T, Bp, D) time-major
    if pad_t:
        x_tm = jnp.pad(x_tm, ((0, pad_t), (0, 0), (0, 0)))
    xw = (jnp.dot(x_tm.reshape(Tp * Bp, D).astype(mm_dtype),
                  w_ih.astype(mm_dtype),
                  preferred_element_type=jnp.float32)
          + bias.astype(jnp.float32)[None, :]).reshape(Tp, Bp, 4 * H)

    whh = w_hh.astype(mm_dtype)
    len_col = lengths.astype(jnp.int32).reshape(Bp, 1)

    # ---- batch tiling: leading "parallel" grid axis (2nd TensorCore on v7x) ----
    BB = 8 if (Bp > 8 and Bp % 8 == 0) else Bp
    nb = Bp // BB

    kernel = functools.partial(_lstm_kernel, hidden_size=H, t_chunk=t_chunk)

    out_tm, h_n, c_n = pl.pallas_call(
        kernel,
        out_shape=(
            jax.ShapeDtypeStruct((Tp, Bp, H), jnp.float32),
            jax.ShapeDtypeStruct((Bp, H), jnp.float32),
            jax.ShapeDtypeStruct((Bp, H), jnp.float32),
        ),
        grid_spec=pltpu.PrefetchScalarGridSpec(
            num_scalar_prefetch=0,
            grid=(nb, n_tc),
            in_specs=[
                pl.BlockSpec((BB, 1), lambda b, t: (b, 0)),               # lengths
                pl.BlockSpec((BB, H), lambda b, t: (b, 0)),               # h0
                pl.BlockSpec((BB, H), lambda b, t: (b, 0)),               # c0
                pl.BlockSpec((t_chunk, BB, 4 * H), lambda b, t: (t, b, 0)),  # xW + bias
                # W_hh is resident (constant block index). For large H on v7x,
                # consider pipeline_mode=pl.Buffered(1) / vmem_limit_bytes to
                # avoid double-buffering the resident weights.
                pl.BlockSpec((H, 4 * H), lambda b, t: (0, 0)),            # W_hh (bf16)
            ],
            out_specs=[
                pl.BlockSpec((t_chunk, BB, H), lambda b, t: (t, b, 0)),   # chunked outputs
                pl.BlockSpec((BB, H), lambda b, t: (b, 0)),               # final h (resident)
                pl.BlockSpec((BB, H), lambda b, t: (b, 0)),               # final c (resident)
            ],
            scratch_shapes=[
                pltpu.VMEM((BB, H), jnp.float32),                         # h carry (f32)
                pltpu.VMEM((BB, H), jnp.float32),                         # c carry (f32)
            ],
        ),
        compiler_params=pltpu.CompilerParams(
            dimension_semantics=("parallel", "arbitrary")),               # time is sequential
    )(len_col, h0, c0, xw, whh)

    out = jnp.swapaxes(out_tm[:T, :B], 0, 1)                              # (B, T, H)
    return out, h_n[:B], c_n[:B]


# -----------------------------------------------------------------------------
# BaseRNN-equivalent wrapper (rnn_type='lstm', num_layers=1, unidirectional).
# -----------------------------------------------------------------------------
def base_rnn_forward(params, inputs, lengths=None, initial_state=None,
                     batch_first=True, t_chunk=16, use_bf16=True):
    if not batch_first:
        inputs = jnp.swapaxes(inputs, 0, 1)        # -> (B, T, D)
    B, T, D = inputs.shape
    H = params["w_hh"].shape[0]

    if lengths is None:
        lengths = jnp.full((B,), T, dtype=jnp.int32)
    if initial_state is None:
        h0 = jnp.zeros((B, H), jnp.float32)
        c0 = jnp.zeros((B, H), jnp.float32)
    else:
        h0 = initial_state[0][0]                    # (1, B, H) -> (B, H)
        c0 = initial_state[1][0]

    outputs, h_n, c_n = lstm_pallas(inputs, lengths, h0, c0,
                                    params["w_ih"], params["w_hh"], params["bias"],
                                    t_chunk=t_chunk, use_bf16=use_bf16)
    if not batch_first:
        outputs = jnp.swapaxes(outputs, 0, 1)
    last_state = (h_n[None], c_n[None])             # (num_layers*num_dirs=1, B, H)
    # TODO(synk): bidirectional / multi-layer / dropout BaseRNN variants not instantiated here.
    return outputs, last_state


# -----------------------------------------------------------------------------
# Pure-JAX reference (same masked-LSTM semantics, same bf16 matmul casts).
# -----------------------------------------------------------------------------
def lstm_ref(x, lengths, h0, c0, w_ih, w_hh, bias, use_bf16=True):
    B, T, D = x.shape
    H = h0.shape[-1]
    mm = jnp.bfloat16 if use_bf16 else jnp.float32
    w_ih_c = w_ih.astype(mm)
    w_hh_c = w_hh.astype(mm)

    def step(carry, inp):
        h, c = carry
        x_t, t = inp
        gates = (jnp.dot(x_t.astype(mm), w_ih_c, preferred_element_type=jnp.float32)
                 + jnp.dot(h.astype(mm), w_hh_c, preferred_element_type=jnp.float32)
                 + bias)
        i_g = jax.nn.sigmoid(gates[:, :H])
        f_g = jax.nn.sigmoid(gates[:, H:2 * H])
        g_g = jnp.tanh(gates[:, 2 * H:3 * H])
        o_g = jax.nn.sigmoid(gates[:, 3 * H:])
        c_new = f_g * c + i_g * g_g
        h_new = o_g * jnp.tanh(c_new)
        mask = (t < lengths)[:, None]
        h2 = jnp.where(mask, h_new, h)
        c2 = jnp.where(mask, c_new, c)
        out = jnp.where(mask, h_new, 0.0)
        return (h2, c2), out

    (h_n, c_n), outs = lax.scan(step, (h0, c0),
                                (jnp.swapaxes(x, 0, 1), jnp.arange(T)))
    return jnp.swapaxes(outs, 0, 1), h_n, c_n


if __name__ == "__main__":
    # Small shapes consistent with the module: batch=4, seq=8, input=16, hidden=32.
    B, T, D, H = 4, 8, 16, 32
    key = jax.random.PRNGKey(0)
    kx, kw1, kw2, kb = jax.random.split(key, 4)

    bound = 1.0 / (H ** 0.5)    # PyTorch default uniform init range
    params = {
        # stored transposed vs. torch: (D, 4H) / (H, 4H), gate order [i, f, g, o]
        "w_ih": jax.random.uniform(kw1, (D, 4 * H), jnp.float32, -bound, bound),
        "w_hh": jax.random.uniform(kw2, (H, 4 * H), jnp.float32, -bound, bound),
        # combined bias_ih + bias_hh
        "bias": jax.random.uniform(kb, (4 * H,), jnp.float32, -bound, bound),
    }

    x = jax.random.normal(kx, (B, T, D), jnp.float32)
    lengths = jnp.array([8, 5, 3, 6], dtype=jnp.int32)

    outputs, (h_n, c_n) = base_rnn_forward(params, x, lengths)
    outputs = jax.block_until_ready(outputs)
    h_n = jax.block_until_ready(h_n)
    c_n = jax.block_until_ready(c_n)

    # Verify against pure-JAX reference (same bf16-operand / f32-accumulate math).
    h0 = jnp.zeros((B, H), jnp.float32)
    c0 = jnp.zeros((B, H), jnp.float32)
    ref_out, ref_h, ref_c = lstm_ref(x, lengths, h0, c0,
                                     params["w_ih"], params["w_hh"], params["bias"],
                                     use_bf16=True)

    assert outputs.shape == (B, T, H)
    assert h_n.shape == (1, B, H) and c_n.shape == (1, B, H)
    assert jnp.allclose(outputs, ref_out, atol=5e-3, rtol=1e-3), "outputs mismatch"
    assert jnp.allclose(h_n[0], ref_h, atol=5e-3, rtol=1e-3), "h_n mismatch"
    assert jnp.allclose(c_n[0], ref_c, atol=5e-3, rtol=1e-3), "c_n mismatch"

    print("KERNEL_OK")
</pallas_src>

<mosaic_0001>
module attributes {stable_mosaic.version = 11 : i64} {
  func.func @_lstm_kernel(%arg0: i32, %arg1: i32, %arg2: memref<8x1xi32, #tpu.memory_space<vmem>>, %arg3: memref<8x32xf32, #tpu.memory_space<vmem>>, %arg4: memref<8x32xf32, #tpu.memory_space<vmem>>, %arg5: memref<8x8x128xf32, #tpu.memory_space<vmem>>, %arg6: memref<32x128xbf16, #tpu.memory_space<vmem>>, %arg7: memref<8x8x32xf32, #tpu.memory_space<vmem>>, %arg8: memref<8x32xf32, #tpu.memory_space<vmem>>, %arg9: memref<8x32xf32, #tpu.memory_space<vmem>>, %arg10: memref<8x32xf32, #tpu.memory_space<vmem>>, %arg11: memref<8x32xf32, #tpu.memory_space<vmem>>) attributes {dimension_semantics = [#tpu.dimension_semantics<parallel>, #tpu.dimension_semantics<arbitrary>], iteration_bounds = array<i64: 1, 1>, scalar_prefetch = 0 : i64, scratch_operands = 2 : i64, tpu.core_type = #tpu.core_type<tc>, window_params = [{transform_indices = @transform_0, window_bounds = array<i64: 8, 1>}, {transform_indices = @transform_1, window_bounds = array<i64: 8, 32>}, {transform_indices = @transform_2, window_bounds = array<i64: 8, 32>}, {transform_indices = @transform_3, window_bounds = array<i64: 8, 8, 128>}, {pipeline_mode = #tpu.pipeline_mode<synchronous>, transform_indices = @transform_4, window_bounds = array<i64: 32, 128>}, {transform_indices = @transform_5, window_bounds = array<i64: 8, 8, 32>}, {transform_indices = @transform_6, window_bounds = array<i64: 8, 32>}, {transform_indices = @transform_7, window_bounds = array<i64: 8, 32>}]} {
    %c0_i32 = arith.constant 0 : i32
    %0 = arith.cmpi eq, %arg1, %c0_i32 : i32
    %1 = arith.extui %0 : i1 to i32
    %c0_i32_0 = arith.constant 0 : i32
    %2 = arith.cmpi ne, %1, %c0_i32_0 : i32
    scf.if %2 {
      %c0_87 = arith.constant 0 : index
      %c0_88 = arith.constant 0 : index
      %397 = vector.load %arg3[%c0_87, %c0_88] : memref<8x32xf32, #tpu.memory_space<vmem>>, vector<8x32xf32>
      %c0_89 = arith.constant 0 : index
      %c0_90 = arith.constant 0 : index
      %398 = vector.load %arg10[%c0_89, %c0_90] : memref<8x32xf32, #tpu.memory_space<vmem>>, vector<8x32xf32>
      tpu.vector_store %arg10[%c0_89, %c0_90], %397 {strides = array<i32>} : memref<8x32xf32, #tpu.memory_space<vmem>>, vector<8x32xf32>,
      %c0_91 = arith.constant 0 : index
      %c0_92 = arith.constant 0 : index
      %399 = vector.load %arg4[%c0_91, %c0_92] : memref<8x32xf32, #tpu.memory_space<vmem>>, vector<8x32xf32>
      %c0_93 = arith.constant 0 : index
      %c0_94 = arith.constant 0 : index
      %400 = vector.load %arg11[%c0_93, %c0_94] : memref<8x32xf32, #tpu.memory_space<vmem>>, vector<8x32xf32>
      tpu.vector_store %arg11[%c0_93, %c0_94], %399 {strides = array<i32>} : memref<8x32xf32, #tpu.memory_space<vmem>>, vector<8x32xf32>,
    } else {
    }
    %c0 = arith.constant 0 : index
    %c0_1 = arith.constant 0 : index
    %3 = vector.load %arg2[%c0, %c0_1] : memref<8x1xi32, #tpu.memory_space<vmem>>, vector<8x1xi32>
    %c0_2 = arith.constant 0 : index
    %c0_3 = arith.constant 0 : index
    %4 = vector.load %arg6[%c0_2, %c0_3] : memref<32x128xbf16, #tpu.memory_space<vmem>>, vector<32x128xbf16>
    %c8_i32 = arith.constant 8 : i32
    %5 = arith.muli %arg1, %c8_i32 : i32
    %c0_4 = arith.constant 0 : index
    %c0_5 = arith.constant 0 : index
    %6 = vector.load %arg10[%c0_4, %c0_5] : memref<8x32xf32, #tpu.memory_space<vmem>>, vector<8x32xf32>
    %c0_6 = arith.constant 0 : index
    %c0_7 = arith.constant 0 : index
    %7 = vector.load %arg11[%c0_6, %c0_7] : memref<8x32xf32, #tpu.memory_space<vmem>>, vector<8x32xf32>
    %c0_i32_8 = arith.constant 0 : i32
    %8 = arith.index_cast %c0_i32_8 : i32 to index
    %c0_9 = arith.constant 0 : index
    %c0_10 = arith.constant 0 : index
    %9 = vector.load %arg5[%8, %c0_9, %c0_10] : memref<8x8x128xf32, #tpu.memory_space<vmem>>, vector<1x8x128xf32>
    %10 = vector.shape_cast %9 : vector<1x8x128xf32> to vector<8x128xf32>
    %11 = arith.truncf %6 : vector<8x32xf32> to vector<8x32xbf16>
    %cst = arith.constant dense<0.000000e+00> : vector<8x128xf32>
    %12 = tpu.matmul %11, %4, %cst {dimension_numbers = #tpu.dot_dimension_numbers<[1], [0], [0], [1], [0, 0, 1, 1], [], []>} : vector<8x32xbf16>, vector<32x128xbf16>, vector<8x128xf32> -> vector<8x128xf32>
    %13 = arith.addf %10, %12 : vector<8x128xf32>
    %14 = vector.extract_strided_slice %13 {offsets = [0, 0], sizes = [8, 32], strides = [1, 1]} : vector<8x128xf32> to vector<8x32xf32>
    %15 = arith.negf %14 : vector<8x32xf32>
    %16 = math.exp %15 : vector<8x32xf32>
    %cst_11 = arith.constant 1.000000e+00 : f32
    %17 = vector.broadcast %cst_11 : f32 to vector<8x32xf32>
    %18 = arith.addf %17, %16 : vector<8x32xf32>
    %19 = arith.divf %17, %18 : vector<8x32xf32>
    %20 = vector.extract_strided_slice %13 {offsets = [0, 32], sizes = [8, 32], strides = [1, 1]} : vector<8x128xf32> to vector<8x32xf32>
    %21 = arith.negf %20 : vector<8x32xf32>
    %22 = math.exp %21 : vector<8x32xf32>
    %cst_12 = arith.constant 1.000000e+00 : f32
    %23 = vector.broadcast %cst_12 : f32 to vector<8x32xf32>
    %24 = arith.addf %23, %22 : vector<8x32xf32>
    %25 = arith.divf %23, %24 : vector<8x32xf32>
    %26 = vector.extract_strided_slice %13 {offsets = [0, 64], sizes = [8, 32], strides = [1, 1]} : vector<8x128xf32> to vector<8x32xf32>
    %27 = math.tanh %26 : vector<8x32xf32>
    %28 = vector.extract_strided_slice %13 {offsets = [0, 96], sizes = [8, 32], strides = [1, 1]} : vector<8x128xf32> to vector<8x32xf32>
    %29 = arith.negf %28 : vector<8x32xf32>
    %30 = math.exp %29 : vector<8x32xf32>
    %cst_13 = arith.constant 1.000000e+00 : f32
    %31 = vector.broadcast %cst_13 : f32 to vector<8x32xf32>
    %32 = arith.addf %31, %30 : vector<8x32xf32>
    %33 = arith.divf %31, %32 : vector<8x32xf32>
    %34 = arith.mulf %25, %7 : vector<8x32xf32>
    %35 = arith.mulf %19, %27 : vector<8x32xf32>
    %36 = arith.addf %34, %35 : vector<8x32xf32>
    %37 = math.tanh %36 : vector<8x32xf32>
    %38 = arith.mulf %33, %37 : vector<8x32xf32>
    %39 = arith.addi %5, %c0_i32_8 : i32
    %40 = vector.broadcast %39 : i32 to vector<8x1xi32>
    %41 = arith.cmpi slt, %40, %3 : vector<8x1xi32>
    %cst_14 = arith.constant 0.000000e+00 : f32
    %42 = vector.broadcast %cst_14 : f32 to vector<8x32xf32>
    %43 = vector.shape_cast %41 : vector<8x1xi1> to vector<8x1xi1>
    %44 = vector.broadcast %43 : vector<8x1xi1> to vector<8x32xi1>
    %45 = arith.select %44, %38, %42 : vector<8x32xi1>, vector<8x32xf32>
    %46 = arith.index_cast %c0_i32_8 : i32 to index
    %c0_15 = arith.constant 0 : index
    %c0_16 = arith.constant 0 : index
    %47 = vector.load %arg7[%46, %c0_15, %c0_16] : memref<8x8x32xf32, #tpu.memory_space<vmem>>, vector<1x8x32xf32>
    %48 = vector.shape_cast %47 : vector<1x8x32xf32> to vector<8x32xf32>
    %49 = vector.shape_cast %45 : vector<8x32xf32> to vector<1x8x32xf32>
    tpu.vector_store %arg7[%46, %c0_15, %c0_16], %49 {strides = array<i32>} : memref<8x8x32xf32, #tpu.memory_space<vmem>>, vector<1x8x32xf32>,
    %50 = vector.shape_cast %41 : vector<8x1xi1> to vector<8x1xi1>
    %51 = vector.broadcast %50 : vector<8x1xi1> to vector<8x32xi1>
    %52 = arith.select %51, %38, %6 : vector<8x32xi1>, vector<8x32xf32>
    %53 = vector.shape_cast %41 : vector<8x1xi1> to vector<8x1xi1>
    %54 = vector.broadcast %53 : vector<8x1xi1> to vector<8x32xi1>
    %55 = arith.select %54, %36, %7 : vector<8x32xi1>, vector<8x32xf32>
    %c1_i32 = arith.constant 1 : i32
    %56 = arith.index_cast %c1_i32 : i32 to index
    %c0_17 = arith.constant 0 : index
    %c0_18 = arith.constant 0 : index
    %57 = vector.load %arg5[%56, %c0_17, %c0_18] : memref<8x8x128xf32, #tpu.memory_space<vmem>>, vector<1x8x128xf32>
    %58 = vector.shape_cast %57 : vector<1x8x128xf32> to vector<8x128xf32>
    %59 = arith.truncf %52 : vector<8x32xf32> to vector<8x32xbf16>
    %cst_19 = arith.constant dense<0.000000e+00> : vector<8x128xf32>
    %60 = tpu.matmul %59, %4, %cst_19 {dimension_numbers = #tpu.dot_dimension_numbers<[1], [0], [0], [1], [0, 0, 1, 1], [], []>} : vector<8x32xbf16>, vector<32x128xbf16>, vector<8x128xf32> -> vector<8x128xf32>
    %61 = arith.addf %58, %60 : vector<8x128xf32>
    %62 = vector.extract_strided_slice %61 {offsets = [0, 0], sizes = [8, 32], strides = [1, 1]} : vector<8x128xf32> to vector<8x32xf32>
    %63 = arith.negf %62 : vector<8x32xf32>
    %64 = math.exp %63 : vector<8x32xf32>
    %cst_20 = arith.constant 1.000000e+00 : f32
    %65 = vector.broadcast %cst_20 : f32 to vector<8x32xf32>
    %66 = arith.addf %65, %64 : vector<8x32xf32>
    %67 = arith.divf %65, %66 : vector<8x32xf32>
    %68 = vector.extract_strided_slice %61 {offsets = [0, 32], sizes = [8, 32], strides = [1, 1]} : vector<8x128xf32> to vector<8x32xf32>
    %69 = arith.negf %68 : vector<8x32xf32>
    %70 = math.exp %69 : vector<8x32xf32>
    %cst_21 = arith.constant 1.000000e+00 : f32
    %71 = vector.broadcast %cst_21 : f32 to vector<8x32xf32>
    %72 = arith.addf %71, %70 : vector<8x32xf32>
    %73 = arith.divf %71, %72 : vector<8x32xf32>
    %74 = vector.extract_strided_slice %61 {offsets = [0, 64], sizes = [8, 32], strides = [1, 1]} : vector<8x128xf32> to vector<8x32xf32>
    %75 = math.tanh %74 : vector<8x32xf32>
    %76 = vector.extract_strided_slice %61 {offsets = [0, 96], sizes = [8, 32], strides = [1, 1]} : vector<8x128xf32> to vector<8x32xf32>
    %77 = arith.negf %76 : vector<8x32xf32>
    %78 = math.exp %77 : vector<8x32xf32>
    %cst_22 = arith.constant 1.000000e+00 : f32
    %79 = vector.broadcast %cst_22 : f32 to vector<8x32xf32>
    %80 = arith.addf %79, %78 : vector<8x32xf32>
    %81 = arith.divf %79, %80 : vector<8x32xf32>
    %82 = arith.mulf %73, %55 : vector<8x32xf32>
    %83 = arith.mulf %67, %75 : vector<8x32xf32>
    %84 = arith.addf %82, %83 : vector<8x32xf32>
    %85 = math.tanh %84 : vector<8x32xf32>
    %86 = arith.mulf %81, %85 : vector<8x32xf32>
    %87 = arith.addi %5, %c1_i32 : i32
    %88 = vector.broadcast %87 : i32 to vector<8x1xi32>
    %89 = arith.cmpi slt, %88, %3 : vector<8x1xi32>
    %cst_23 = arith.constant 0.000000e+00 : f32
    %90 = vector.broadcast %cst_23 : f32 to vector<8x32xf32>
    %91 = vector.shape_cast %89 : vector<8x1xi1> to vector<8x1xi1>
    %92 = vector.broadcast %91 : vector<8x1xi1> to vector<8x32xi1>
    %93 = arith.select %92, %86, %90 : vector<8x32xi1>, vector<8x32xf32>
    %94 = arith.index_cast %c1_i32 : i32 to index
    %c0_24 = arith.constant 0 : index
    %c0_25 = arith.constant 0 : index
    %95 = vector.load %arg7[%94, %c0_24, %c0_25] : memref<8x8x32xf32, #tpu.memory_space<vmem>>, vector<1x8x32xf32>
    %96 = vector.shape_cast %95 : vector<1x8x32xf32> to vector<8x32xf32>
    %97 = vector.shape_cast %93 : vector<8x32xf32> to vector<1x8x32xf32>
    tpu.vector_store %arg7[%94, %c0_24, %c0_25], %97 {strides = array<i32>} : memref<8x8x32xf32, #tpu.memory_space<vmem>>, vector<1x8x32xf32>,
    %98 = vector.shape_cast %89 : vector<8x1xi1> to vector<8x1xi1>
    %99 = vector.broadcast %98 : vector<8x1xi1> to vector<8x32xi1>
    %100 = arith.select %99, %86, %52 : vector<8x32xi1>, vector<8x32xf32>
    %101 = vector.shape_cast %89 : vector<8x1xi1> to vector<8x1xi1>
    %102 = vector.broadcast %101 : vector<8x1xi1> to vector<8x32xi1>
    %103 = arith.select %102, %84, %55 : vector<8x32xi1>, vector<8x32xf32>
    %c2_i32 = arith.constant 2 : i32
    %104 = arith.index_cast %c2_i32 : i32 to index
    %c0_26 = arith.constant 0 : index
    %c0_27 = arith.constant 0 : index
    %105 = vector.load %arg5[%104, %c0_26, %c0_27] : memref<8x8x128xf32, #tpu.memory_space<vmem>>, vector<1x8x128xf32>
    %106 = vector.shape_cast %105 : vector<1x8x128xf32> to vector<8x128xf32>
    %107 = arith.truncf %100 : vector<8x32xf32> to vector<8x32xbf16>
    %cst_28 = arith.constant dense<0.000000e+00> : vector<8x128xf32>
    %108 = tpu.matmul %107, %4, %cst_28 {dimension_numbers = #tpu.dot_dimension_numbers<[1], [0], [0], [1], [0, 0, 1, 1], [], []>} : vector<8x32xbf16>, vector<32x128xbf16>, vector<8x128xf32> -> vector<8x128xf32>
    %109 = arith.addf %106, %108 : vector<8x128xf32>
    %110 = vector.extract_strided_slice %109 {offsets = [0, 0], sizes = [8, 32], strides = [1, 1]} : vector<8x128xf32> to vector<8x32xf32>
    %111 = arith.negf %110 : vector<8x32xf32>
    %112 = math.exp %111 : vector<8x32xf32>
    %cst_29 = arith.constant 1.000000e+00 : f32
    %113 = vector.broadcast %cst_29 : f32 to vector<8x32xf32>
    %114 = arith.addf %113, %112 : vector<8x32xf32>
    %115 = arith.divf %113, %114 : vector<8x32xf32>
    %116 = vector.extract_strided_slice %109 {offsets = [0, 32], sizes = [8, 32], strides = [1, 1]} : vector<8x128xf32> to vector<8x32xf32>
    %117 = arith.negf %116 : vector<8x32xf32>
    %118 = math.exp %117 : vector<8x32xf32>
    %cst_30 = arith.constant 1.000000e+00 : f32
    %119 = vector.broadcast %cst_30 : f32 to vector<8x32xf32>
    %120 = arith.addf %119, %118 : vector<8x32xf32>
    %121 = arith.divf %119, %120 : vector<8x32xf32>
    %122 = vector.extract_strided_slice %109 {offsets = [0, 64], sizes = [8, 32], strides = [1, 1]} : vector<8x128xf32> to vector<8x32xf32>
    %123 = math.tanh %122 : vector<8x32xf32>
    %124 = vector.extract_strided_slice %109 {offsets = [0, 96], sizes = [8, 32], strides = [1, 1]} : vector<8x128xf32> to vector<8x32xf32>
    %125 = arith.negf %124 : vector<8x32xf32>
    %126 = math.exp %125 : vector<8x32xf32>
    %cst_31 = arith.constant 1.000000e+00 : f32
    %127 = vector.broadcast %cst_31 : f32 to vector<8x32xf32>
    %128 = arith.addf %127, %126 : vector<8x32xf32>
    %129 = arith.divf %127, %128 : vector<8x32xf32>
    %130 = arith.mulf %121, %103 : vector<8x32xf32>
    %131 = arith.mulf %115, %123 : vector<8x32xf32>
    %132 = arith.addf %130, %131 : vector<8x32xf32>
    %133 = math.tanh %132 : vector<8x32xf32>
    %134 = arith.mulf %129, %133 : vector<8x32xf32>
    %135 = arith.addi %5, %c2_i32 : i32
    %136 = vector.broadcast %135 : i32 to vector<8x1xi32>
    %137 = arith.cmpi slt, %136, %3 : vector<8x1xi32>
    %cst_32 = arith.constant 0.000000e+00 : f32
    %138 = vector.broadcast %cst_32 : f32 to vector<8x32xf32>
    %139 = vector.shape_cast %137 : vector<8x1xi1> to vector<8x1xi1>
    %140 = vector.broadcast %139 : vector<8x1xi1> to vector<8x32xi1>
    %141 = arith.select %140, %134, %138 : vector<8x32xi1>, vector<8x32xf32>
    %142 = arith.index_cast %c2_i32 : i32 to index
    %c0_33 = arith.constant 0 : index
    %c0_34 = arith.constant 0 : index
    %143 = vector.load %arg7[%142, %c0_33, %c0_34] : memref<8x8x32xf32, #tpu.memory_space<vmem>>, vector<1x8x32xf32>
    %144 = vector.shape_cast %143 : vector<1x8x32xf32> to vector<8x32xf32>
    %145 = vector.shape_cast %141 : vector<8x32xf32> to vector<1x8x32xf32>
    tpu.vector_store %arg7[%142, %c0_33, %c0_34], %145 {strides = array<i32>} : memref<8x8x32xf32, #tpu.memory_space<vmem>>, vector<1x8x32xf32>,
    %146 = vector.shape_cast %137 : vector<8x1xi1> to vector<8x1xi1>
    %147 = vector.broadcast %146 : vector<8x1xi1> to vector<8x32xi1>
    %148 = arith.select %147, %134, %100 : vector<8x32xi1>, vector<8x32xf32>
    %149 = vector.shape_cast %137 : vector<8x1xi1> to vector<8x1xi1>
    %150 = vector.broadcast %149 : vector<8x1xi1> to vector<8x32xi1>
    %151 = arith.select %150, %132, %103 : vector<8x32xi1>, vector<8x32xf32>
    %c3_i32 = arith.constant 3 : i32
    %152 = arith.index_cast %c3_i32 : i32 to index
    %c0_35 = arith.constant 0 : index
    %c0_36 = arith.constant 0 : index
    %153 = vector.load %arg5[%152, %c0_35, %c0_36] : memref<8x8x128xf32, #tpu.memory_space<vmem>>, vector<1x8x128xf32>
    %154 = vector.shape_cast %153 : vector<1x8x128xf32> to vector<8x128xf32>
    %155 = arith.truncf %148 : vector<8x32xf32> to vector<8x32xbf16>
    %cst_37 = arith.constant dense<0.000000e+00> : vector<8x128xf32>
    %156 = tpu.matmul %155, %4, %cst_37 {dimension_numbers = #tpu.dot_dimension_numbers<[1], [0], [0], [1], [0, 0, 1, 1], [], []>} : vector<8x32xbf16>, vector<32x128xbf16>, vector<8x128xf32> -> vector<8x128xf32>
    %157 = arith.addf %154, %156 : vector<8x128xf32>
    %158 = vector.extract_strided_slice %157 {offsets = [0, 0], sizes = [8, 32], strides = [1, 1]} : vector<8x128xf32> to vector<8x32xf32>
    %159 = arith.negf %158 : vector<8x32xf32>
    %160 = math.exp %159 : vector<8x32xf32>
    %cst_38 = arith.constant 1.000000e+00 : f32
    %161 = vector.broadcast %cst_38 : f32 to vector<8x32xf32>
    %162 = arith.addf %161, %160 : vector<8x32xf32>
    %163 = arith.divf %161, %162 : vector<8x32xf32>
    %164 = vector.extract_strided_slice %157 {offsets = [0, 32], sizes = [8, 32], strides = [1, 1]} : vector<8x128xf32> to vector<8x32xf32>
    %165 = arith.negf %164 : vector<8x32xf32>
    %166 = math.exp %165 : vector<8x32xf32>
    %cst_39 = arith.constant 1.000000e+00 : f32
    %167 = vector.broadcast %cst_39 : f32 to vector<8x32xf32>
    %168 = arith.addf %167, %166 : vector<8x32xf32>
    %169 = arith.divf %167, %168 : vector<8x32xf32>
    %170 = vector.extract_strided_slice %157 {offsets = [0, 64], sizes = [8, 32], strides = [1, 1]} : vector<8x128xf32> to vector<8x32xf32>
    %171 = math.tanh %170 : vector<8x32xf32>
    %172 = vector.extract_strided_slice %157 {offsets = [0, 96], sizes = [8, 32], strides = [1, 1]} : vector<8x128xf32> to vector<8x32xf32>
    %173 = arith.negf %172 : vector<8x32xf32>
    %174 = math.exp %173 : vector<8x32xf32>
    %cst_40 = arith.constant 1.000000e+00 : f32
    %175 = vector.broadcast %cst_40 : f32 to vector<8x32xf32>
    %176 = arith.addf %175, %174 : vector<8x32xf32>
    %177 = arith.divf %175, %176 : vector<8x32xf32>
    %178 = arith.mulf %169, %151 : vector<8x32xf32>
    %179 = arith.mulf %163, %171 : vector<8x32xf32>
    %180 = arith.addf %178, %179 : vector<8x32xf32>
    %181 = math.tanh %180 : vector<8x32xf32>
    %182 = arith.mulf %177, %181 : vector<8x32xf32>
    %183 = arith.addi %5, %c3_i32 : i32
    %184 = vector.broadcast %183 : i32 to vector<8x1xi32>
    %185 = arith.cmpi slt, %184, %3 : vector<8x1xi32>
    %cst_41 = arith.constant 0.000000e+00 : f32
    %186 = vector.broadcast %cst_41 : f32 to vector<8x32xf32>
    %187 = vector.shape_cast %185 : vector<8x1xi1> to vector<8x1xi1>
    %188 = vector.broadcast %187 : vector<8x1xi1> to vector<8x32xi1>
    %189 = arith.select %188, %182, %186 : vector<8x32xi1>, vector<8x32xf32>
    %190 = arith.index_cast %c3_i32 : i32 to index
    %c0_42 = arith.constant 0 : index
    %c0_43 = arith.constant 0 : index
    %191 = vector.load %arg7[%190, %c0_42, %c0_43] : memref<8x8x32xf32, #tpu.memory_space<vmem>>, vector<1x8x32xf32>
    %192 = vector.shape_cast %191 : vector<1x8x32xf32> to vector<8x32xf32>
    %193 = vector.shape_cast %189 : vector<8x32xf32> to vector<1x8x32xf32>
    tpu.vector_store %arg7[%190, %c0_42, %c0_43], %193 {strides = array<i32>} : memref<8x8x32xf32, #tpu.memory_space<vmem>>, vector<1x8x32xf32>,
    %194 = vector.shape_cast %185 : vector<8x1xi1> to vector<8x1xi1>
    %195 = vector.broadcast %194 : vector<8x1xi1> to vector<8x32xi1>
    %196 = arith.select %195, %182, %148 : vector<8x32xi1>, vector<8x32xf32>
    %197 = vector.shape_cast %185 : vector<8x1xi1> to vector<8x1xi1>
    %198 = vector.broadcast %197 : vector<8x1xi1> to vector<8x32xi1>
    %199 = arith.select %198, %180, %151 : vector<8x32xi1>, vector<8x32xf32>
    %c4_i32 = arith.constant 4 : i32
    %200 = arith.index_cast %c4_i32 : i32 to index
    %c0_44 = arith.constant 0 : index
    %c0_45 = arith.constant 0 : index
    %201 = vector.load %arg5[%200, %c0_44, %c0_45] : memref<8x8x128xf32, #tpu.memory_space<vmem>>, vector<1x8x128xf32>
    %202 = vector.shape_cast %201 : vector<1x8x128xf32> to vector<8x128xf32>
    %203 = arith.truncf %196 : vector<8x32xf32> to vector<8x32xbf16>
    %cst_46 = arith.constant dense<0.000000e+00> : vector<8x128xf32>
    %204 = tpu.matmul %203, %4, %cst_46 {dimension_numbers = #tpu.dot_dimension_numbers<[1], [0], [0], [1], [0, 0, 1, 1], [], []>} : vector<8x32xbf16>, vector<32x128xbf16>, vector<8x128xf32> -> vector<8x128xf32>
    %205 = arith.addf %202, %204 : vector<8x128xf32>
    %206 = vector.extract_strided_slice %205 {offsets = [0, 0], sizes = [8, 32], strides = [1, 1]} : vector<8x128xf32> to vector<8x32xf32>
    %207 = arith.negf %206 : vector<8x32xf32>
    %208 = math.exp %207 : vector<8x32xf32>
    %cst_47 = arith.constant 1.000000e+00 : f32
    %209 = vector.broadcast %cst_47 : f32 to vector<8x32xf32>
    %210 = arith.addf %209, %208 : vector<8x32xf32>
    %211 = arith.divf %209, %210 : vector<8x32xf32>
    %212 = vector.extract_strided_slice %205 {offsets = [0, 32], sizes = [8, 32], strides = [1, 1]} : vector<8x128xf32> to vector<8x32xf32>
    %213 = arith.negf %212 : vector<8x32xf32>
    %214 = math.exp %213 : vector<8x32xf32>
    %cst_48 = arith.constant 1.000000e+00 : f32
    %215 = vector.broadcast %cst_48 : f32 to vector<8x32xf32>
    %216 = arith.addf %215, %214 : vector<8x32xf32>
    %217 = arith.divf %215, %216 : vector<8x32xf32>
    %218 = vector.extract_strided_slice %205 {offsets = [0, 64], sizes = [8, 32], strides = [1, 1]} : vector<8x128xf32> to vector<8x32xf32>
    %219 = math.tanh %218 : vector<8x32xf32>
    %220 = vector.extract_strided_slice %205 {offsets = [0, 96], sizes = [8, 32], strides = [1, 1]} : vector<8x128xf32> to vector<8x32xf32>
    %221 = arith.negf %220 : vector<8x32xf32>
    %222 = math.exp %221 : vector<8x32xf32>
    %cst_49 = arith.constant 1.000000e+00 : f32
    %223 = vector.broadcast %cst_49 : f32 to vector<8x32xf32>
    %224 = arith.addf %223, %222 : vector<8x32xf32>
    %225 = arith.divf %223, %224 : vector<8x32xf32>
    %226 = arith.mulf %217, %199 : vector<8x32xf32>
    %227 = arith.mulf %211, %219 : vector<8x32xf32>
    %228 = arith.addf %226, %227 : vector<8x32xf32>
    %229 = math.tanh %228 : vector<8x32xf32>
    %230 = arith.mulf %225, %229 : vector<8x32xf32>
    %231 = arith.addi %5, %c4_i32 : i32
    %232 = vector.broadcast %231 : i32 to vector<8x1xi32>
    %233 = arith.cmpi slt, %232, %3 : vector<8x1xi32>
    %cst_50 = arith.constant 0.000000e+00 : f32
    %234 = vector.broadcast %cst_50 : f32 to vector<8x32xf32>
    %235 = vector.shape_cast %233 : vector<8x1xi1> to vector<8x1xi1>
    %236 = vector.broadcast %235 : vector<8x1xi1> to vector<8x32xi1>
    %237 = arith.select %236, %230, %234 : vector<8x32xi1>, vector<8x32xf32>
    %238 = arith.index_cast %c4_i32 : i32 to index
    %c0_51 = arith.constant 0 : index
    %c0_52 = arith.constant 0 : index
    %239 = vector.load %arg7[%238, %c0_51, %c0_52] : memref<8x8x32xf32, #tpu.memory_space<vmem>>, vector<1x8x32xf32>
    %240 = vector.shape_cast %239 : vector<1x8x32xf32> to vector<8x32xf32>
    %241 = vector.shape_cast %237 : vector<8x32xf32> to vector<1x8x32xf32>
    tpu.vector_store %arg7[%238, %c0_51, %c0_52], %241 {strides = array<i32>} : memref<8x8x32xf32, #tpu.memory_space<vmem>>, vector<1x8x32xf32>,
    %242 = vector.shape_cast %233 : vector<8x1xi1> to vector<8x1xi1>
    %243 = vector.broadcast %242 : vector<8x1xi1> to vector<8x32xi1>
    %244 = arith.select %243, %230, %196 : vector<8x32xi1>, vector<8x32xf32>
    %245 = vector.shape_cast %233 : vector<8x1xi1> to vector<8x1xi1>
    %246 = vector.broadcast %245 : vector<8x1xi1> to vector<8x32xi1>
    %247 = arith.select %246, %228, %199 : vector<8x32xi1>, vector<8x32xf32>
    %c5_i32 = arith.constant 5 : i32
    %248 = arith.index_cast %c5_i32 : i32 to index
    %c0_53 = arith.constant 0 : index
    %c0_54 = arith.constant 0 : index
    %249 = vector.load %arg5[%248, %c0_53, %c0_54] : memref<8x8x128xf32, #tpu.memory_space<vmem>>, vector<1x8x128xf32>
    %250 = vector.shape_cast %249 : vector<1x8x128xf32> to vector<8x128xf32>
    %251 = arith.truncf %244 : vector<8x32xf32> to vector<8x32xbf16>
    %cst_55 = arith.constant dense<0.000000e+00> : vector<8x128xf32>
    %252 = tpu.matmul %251, %4, %cst_55 {dimension_numbers = #tpu.dot_dimension_numbers<[1], [0], [0], [1], [0, 0, 1, 1], [], []>} : vector<8x32xbf16>, vector<32x128xbf16>, vector<8x128xf32> -> vector<8x128xf32>
    %253 = arith.addf %250, %252 : vector<8x128xf32>
    %254 = vector.extract_strided_slice %253 {offsets = [0, 0], sizes = [8, 32], strides = [1, 1]} : vector<8x128xf32> to vector<8x32xf32>
    %255 = arith.negf %254 : vector<8x32xf32>
    %256 = math.exp %255 : vector<8x32xf32>
    %cst_56 = arith.constant 1.000000e+00 : f32
    %257 = vector.broadcast %cst_56 : f32 to vector<8x32xf32>
    %258 = arith.addf %257, %256 : vector<8x32xf32>
    %259 = arith.divf %257, %258 : vector<8x32xf32>
    %260 = vector.extract_strided_slice %253 {offsets = [0, 32], sizes = [8, 32], strides = [1, 1]} : vector<8x128xf32> to vector<8x32xf32>
    %261 = arith.negf %260 : vector<8x32xf32>
    %262 = math.exp %261 : vector<8x32xf32>
    %cst_57 = arith.constant 1.000000e+00 : f32
    %263 = vector.broadcast %cst_57 : f32 to vector<8x32xf32>
    %264 = arith.addf %263, %262 : vector<8x32xf32>
    %265 = arith.divf %263, %264 : vector<8x32xf32>
    %266 = vector.extract_strided_slice %253 {offsets = [0, 64], sizes = [8, 32], strides = [1, 1]} : vector<8x128xf32> to vector<8x32xf32>
    %267 = math.tanh %266 : vector<8x32xf32>
    %268 = vector.extract_strided_slice %253 {offsets = [0, 96], sizes = [8, 32], strides = [1, 1]} : vector<8x128xf32> to vector<8x32xf32>
    %269 = arith.negf %268 : vector<8x32xf32>
    %270 = math.exp %269 : vector<8x32xf32>
    %cst_58 = arith.constant 1.000000e+00 : f32
    %271 = vector.broadcast %cst_58 : f32 to vector<8x32xf32>
    %272 = arith.addf %271, %270 : vector<8x32xf32>
    %273 = arith.divf %271, %272 : vector<8x32xf32>
    %274 = arith.mulf %265, %247 : vector<8x32xf32>
    %275 = arith.mulf %259, %267 : vector<8x32xf32>
    %276 = arith.addf %274, %275 : vector<8x32xf32>
    %277 = math.tanh %276 : vector<8x32xf32>
    %278 = arith.mulf %273, %277 : vector<8x32xf32>
    %279 = arith.addi %5, %c5_i32 : i32
    %280 = vector.broadcast %279 : i32 to vector<8x1xi32>
    %281 = arith.cmpi slt, %280, %3 : vector<8x1xi32>
    %cst_59 = arith.constant 0.000000e+00 : f32
    %282 = vector.broadcast %cst_59 : f32 to vector<8x32xf32>
    %283 = vector.shape_cast %281 : vector<8x1xi1> to vector<8x1xi1>
    %284 = vector.broadcast %283 : vector<8x1xi1> to vector<8x32xi1>
    %285 = arith.select %284, %278, %282 : vector<8x32xi1>, vector<8x32xf32>
    %286 = arith.index_cast %c5_i32 : i32 to index
    %c0_60 = arith.constant 0 : index
    %c0_61 = arith.constant 0 : index
    %287 = vector.load %arg7[%286, %c0_60, %c0_61] : memref<8x8x32xf32, #tpu.memory_space<vmem>>, vector<1x8x32xf32>
    %288 = vector.shape_cast %287 : vector<1x8x32xf32> to vector<8x32xf32>
    %289 = vector.shape_cast %285 : vector<8x32xf32> to vector<1x8x32xf32>
    tpu.vector_store %arg7[%286, %c0_60, %c0_61], %289 {strides = array<i32>} : memref<8x8x32xf32, #tpu.memory_space<vmem>>, vector<1x8x32xf32>,
    %290 = vector.shape_cast %281 : vector<8x1xi1> to vector<8x1xi1>
    %291 = vector.broadcast %290 : vector<8x1xi1> to vector<8x32xi1>
    %292 = arith.select %291, %278, %244 : vector<8x32xi1>, vector<8x32xf32>
    %293 = vector.shape_cast %281 : vector<8x1xi1> to vector<8x1xi1>
    %294 = vector.broadcast %293 : vector<8x1xi1> to vector<8x32xi1>
    %295 = arith.select %294, %276, %247 : vector<8x32xi1>, vector<8x32xf32>
    %c6_i32 = arith.constant 6 : i32
    %296 = arith.index_cast %c6_i32 : i32 to index
    %c0_62 = arith.constant 0 : index
    %c0_63 = arith.constant 0 : index
    %297 = vector.load %arg5[%296, %c0_62, %c0_63] : memref<8x8x128xf32, #tpu.memory_space<vmem>>, vector<1x8x128xf32>
    %298 = vector.shape_cast %297 : vector<1x8x128xf32> to vector<8x128xf32>
    %299 = arith.truncf %292 : vector<8x32xf32> to vector<8x32xbf16>
    %cst_64 = arith.constant dense<0.000000e+00> : vector<8x128xf32>
    %300 = tpu.matmul %299, %4, %cst_64 {dimension_numbers = #tpu.dot_dimension_numbers<[1], [0], [0], [1], [0, 0, 1, 1], [], []>} : vector<8x32xbf16>, vector<32x128xbf16>, vector<8x128xf32> -> vector<8x128xf32>
    %301 = arith.addf %298, %300 : vector<8x128xf32>
    %302 = vector.extract_strided_slice %301 {offsets = [0, 0], sizes = [8, 32], strides = [1, 1]} : vector<8x128xf32> to vector<8x32xf32>
    %303 = arith.negf %302 : vector<8x32xf32>
    %304 = math.exp %303 : vector<8x32xf32>
    %cst_65 = arith.constant 1.000000e+00 : f32
    %305 = vector.broadcast %cst_65 : f32 to vector<8x32xf32>
    %306 = arith.addf %305, %304 : vector<8x32xf32>
    %307 = arith.divf %305, %306 : vector<8x32xf32>
    %308 = vector.extract_strided_slice %301 {offsets = [0, 32], sizes = [8, 32], strides = [1, 1]} : vector<8x128xf32> to vector<8x32xf32>
    %309 = arith.negf %308 : vector<8x32xf32>
    %310 = math.exp %309 : vector<8x32xf32>
    %cst_66 = arith.constant 1.000000e+00 : f32
    %311 = vector.broadcast %cst_66 : f32 to vector<8x32xf32>
    %312 = arith.addf %311, %310 : vector<8x32xf32>
    %313 = arith.divf %311, %312 : vector<8x32xf32>
    %314 = vector.extract_strided_slice %301 {offsets = [0, 64], sizes = [8, 32], strides = [1, 1]} : vector<8x128xf32> to vector<8x32xf32>
    %315 = math.tanh %314 : vector<8x32xf32>
    %316 = vector.extract_strided_slice %301 {offsets = [0, 96], sizes = [8, 32], strides = [1, 1]} : vector<8x128xf32> to vector<8x32xf32>
    %317 = arith.negf %316 : vector<8x32xf32>
    %318 = math.exp %317 : vector<8x32xf32>
    %cst_67 = arith.constant 1.000000e+00 : f32
    %319 = vector.broadcast %cst_67 : f32 to vector<8x32xf32>
    %320 = arith.addf %319, %318 : vector<8x32xf32>
    %321 = arith.divf %319, %320 : vector<8x32xf32>
    %322 = arith.mulf %313, %295 : vector<8x32xf32>
    %323 = arith.mulf %307, %315 : vector<8x32xf32>
    %324 = arith.addf %322, %323 : vector<8x32xf32>
    %325 = math.tanh %324 : vector<8x32xf32>
    %326 = arith.mulf %321, %325 : vector<8x32xf32>
    %327 = arith.addi %5, %c6_i32 : i32
    %328 = vector.broadcast %327 : i32 to vector<8x1xi32>
    %329 = arith.cmpi slt, %328, %3 : vector<8x1xi32>
    %cst_68 = arith.constant 0.000000e+00 : f32
    %330 = vector.broadcast %cst_68 : f32 to vector<8x32xf32>
    %331 = vector.shape_cast %329 : vector<8x1xi1> to vector<8x1xi1>
    %332 = vector.broadcast %331 : vector<8x1xi1> to vector<8x32xi1>
    %333 = arith.select %332, %326, %330 : vector<8x32xi1>, vector<8x32xf32>
    %334 = arith.index_cast %c6_i32 : i32 to index
    %c0_69 = arith.constant 0 : index
    %c0_70 = arith.constant 0 : index
    %335 = vector.load %arg7[%334, %c0_69, %c0_70] : memref<8x8x32xf32, #tpu.memory_space<vmem>>, vector<1x8x32xf32>
    %336 = vector.shape_cast %335 : vector<1x8x32xf32> to vector<8x32xf32>
    %337 = vector.shape_cast %333 : vector<8x32xf32> to vector<1x8x32xf32>
    tpu.vector_store %arg7[%334, %c0_69, %c0_70], %337 {strides = array<i32>} : memref<8x8x32xf32, #tpu.memory_space<vmem>>, vector<1x8x32xf32>,
    %338 = vector.shape_cast %329 : vector<8x1xi1> to vector<8x1xi1>
    %339 = vector.broadcast %338 : vector<8x1xi1> to vector<8x32xi1>
    %340 = arith.select %339, %326, %292 : vector<8x32xi1>, vector<8x32xf32>
    %341 = vector.shape_cast %329 : vector<8x1xi1> to vector<8x1xi1>
    %342 = vector.broadcast %341 : vector<8x1xi1> to vector<8x32xi1>
    %343 = arith.select %342, %324, %295 : vector<8x32xi1>, vector<8x32xf32>
    %c7_i32 = arith.constant 7 : i32
    %344 = arith.index_cast %c7_i32 : i32 to index
    %c0_71 = arith.constant 0 : index
    %c0_72 = arith.constant 0 : index
    %345 = vector.load %arg5[%344, %c0_71, %c0_72] : memref<8x8x128xf32, #tpu.memory_space<vmem>>, vector<1x8x128xf32>
    %346 = vector.shape_cast %345 : vector<1x8x128xf32> to vector<8x128xf32>
    %347 = arith.truncf %340 : vector<8x32xf32> to vector<8x32xbf16>
    %cst_73 = arith.constant dense<0.000000e+00> : vector<8x128xf32>
    %348 = tpu.matmul %347, %4, %cst_73 {dimension_numbers = #tpu.dot_dimension_numbers<[1], [0], [0], [1], [0, 0, 1, 1], [], []>} : vector<8x32xbf16>, vector<32x128xbf16>, vector<8x128xf32> -> vector<8x128xf32>
    %349 = arith.addf %346, %348 : vector<8x128xf32>
    %350 = vector.extract_strided_slice %349 {offsets = [0, 0], sizes = [8, 32], strides = [1, 1]} : vector<8x128xf32> to vector<8x32xf32>
    %351 = arith.negf %350 : vector<8x32xf32>
    %352 = math.exp %351 : vector<8x32xf32>
    %cst_74 = arith.constant 1.000000e+00 : f32
    %353 = vector.broadcast %cst_74 : f32 to vector<8x32xf32>
    %354 = arith.addf %353, %352 : vector<8x32xf32>
    %355 = arith.divf %353, %354 : vector<8x32xf32>
    %356 = vector.extract_strided_slice %349 {offsets = [0, 32], sizes = [8, 32], strides = [1, 1]} : vector<8x128xf32> to vector<8x32xf32>
    %357 = arith.negf %356 : vector<8x32xf32>
    %358 = math.exp %357 : vector<8x32xf32>
    %cst_75 = arith.constant 1.000000e+00 : f32
    %359 = vector.broadcast %cst_75 : f32 to vector<8x32xf32>
    %360 = arith.addf %359, %358 : vector<8x32xf32>
    %361 = arith.divf %359, %360 : vector<8x32xf32>
    %362 = vector.extract_strided_slice %349 {offsets = [0, 64], sizes = [8, 32], strides = [1, 1]} : vector<8x128xf32> to vector<8x32xf32>
    %363 = math.tanh %362 : vector<8x32xf32>
    %364 = vector.extract_strided_slice %349 {offsets = [0, 96], sizes = [8, 32], strides = [1, 1]} : vector<8x128xf32> to vector<8x32xf32>
    %365 = arith.negf %364 : vector<8x32xf32>
    %366 = math.exp %365 : vector<8x32xf32>
    %cst_76 = arith.constant 1.000000e+00 : f32
    %367 = vector.broadcast %cst_76 : f32 to vector<8x32xf32>
    %368 = arith.addf %367, %366 : vector<8x32xf32>
    %369 = arith.divf %367, %368 : vector<8x32xf32>
    %370 = arith.mulf %361, %343 : vector<8x32xf32>
    %371 = arith.mulf %355, %363 : vector<8x32xf32>
    %372 = arith.addf %370, %371 : vector<8x32xf32>
    %373 = math.tanh %372 : vector<8x32xf32>
    %374 = arith.mulf %369, %373 : vector<8x32xf32>
    %375 = arith.addi %5, %c7_i32 : i32
    %376 = vector.broadcast %375 : i32 to vector<8x1xi32>
    %377 = arith.cmpi slt, %376, %3 : vector<8x1xi32>
    %cst_77 = arith.constant 0.000000e+00 : f32
    %378 = vector.broadcast %cst_77 : f32 to vector<8x32xf32>
    %379 = vector.shape_cast %377 : vector<8x1xi1> to vector<8x1xi1>
    %380 = vector.broadcast %379 : vector<8x1xi1> to vector<8x32xi1>
    %381 = arith.select %380, %374, %378 : vector<8x32xi1>, vector<8x32xf32>
    %382 = arith.index_cast %c7_i32 : i32 to index
    %c0_78 = arith.constant 0 : index
    %c0_79 = arith.constant 0 : index
    %383 = vector.load %arg7[%382, %c0_78, %c0_79] : memref<8x8x32xf32, #tpu.memory_space<vmem>>, vector<1x8x32xf32>
    %384 = vector.shape_cast %383 : vector<1x8x32xf32> to vector<8x32xf32>
    %385 = vector.shape_cast %381 : vector<8x32xf32> to vector<1x8x32xf32>
    tpu.vector_store %arg7[%382, %c0_78, %c0_79], %385 {strides = array<i32>} : memref<8x8x32xf32, #tpu.memory_space<vmem>>, vector<1x8x32xf32>,
    %386 = vector.shape_cast %377 : vector<8x1xi1> to vector<8x1xi1>
    %387 = vector.broadcast %386 : vector<8x1xi1> to vector<8x32xi1>
    %388 = arith.select %387, %374, %340 : vector<8x32xi1>, vector<8x32xf32>
    %389 = vector.shape_cast %377 : vector<8x1xi1> to vector<8x1xi1>
    %390 = vector.broadcast %389 : vector<8x1xi1> to vector<8x32xi1>
    %391 = arith.select %390, %372, %343 : vector<8x32xi1>, vector<8x32xf32>
    %c8_i32_80 = arith.constant 8 : i32
    %c0_81 = arith.constant 0 : index
    %c0_82 = arith.constant 0 : index
    %392 = vector.load %arg10[%c0_81, %c0_82] : memref<8x32xf32, #tpu.memory_space<vmem>>, vector<8x32xf32>
    tpu.vector_store %arg10[%c0_81, %c0_82], %388 {strides = array<i32>} : memref<8x32xf32, #tpu.memory_space<vmem>>, vector<8x32xf32>,
    %c0_83 = arith.constant 0 : index
    %c0_84 = arith.constant 0 : index
    %393 = vector.load %arg11[%c0_83, %c0_84] : memref<8x32xf32, #tpu.memory_space<vmem>>, vector<8x32xf32>
    tpu.vector_store %arg11[%c0_83, %c0_84], %391 {strides = array<i32>} : memref<8x32xf32, #tpu.memory_space<vmem>>, vector<8x32xf32>,
    %c0_i32_85 = arith.constant 0 : i32
    %394 = arith.cmpi eq, %arg1, %c0_i32_85 : i32
    %395 = arith.extui %394 : i1 to i32
    %c0_i32_86 = arith.constant 0 : i32
    %396 = arith.cmpi ne, %395, %c0_i32_86 : i32
    scf.if %396 {
      %c0_87 = arith.constant 0 : index
      %c0_88 = arith.constant 0 : index
      %397 = vector.load %arg8[%c0_87, %c0_88] : memref<8x32xf32, #tpu.memory_space<vmem>>, vector<8x32xf32>
      tpu.vector_store %arg8[%c0_87, %c0_88], %388 {strides = array<i32>} : memref<8x32xf32, #tpu.memory_space<vmem>>, vector<8x32xf32>,
      %c0_89 = arith.constant 0 : index
      %c0_90 = arith.constant 0 : index
      %398 = vector.load %arg9[%c0_89, %c0_90] : memref<8x32xf32, #tpu.memory_space<vmem>>, vector<8x32xf32>
      tpu.vector_store %arg9[%c0_89, %c0_90], %391 {strides = array<i32>} : memref<8x32xf32, #tpu.memory_space<vmem>>, vector<8x32xf32>,
    } else {
    }
    return
  }
  func.func @transform_0(%arg0: i32, %arg1: i32) -> (i32, i32) {
    %c0_i32 = arith.constant 0 : i32
    %c0_i32_0 = arith.constant 0 : i32
    return %arg0, %c0_i32 : i32, i32
  }
  func.func @transform_1(%arg0: i32, %arg1: i32) -> (i32, i32) {
    %c0_i32 = arith.constant 0 : i32
    %c0_i32_0 = arith.constant 0 : i32
    return %arg0, %c0_i32 : i32, i32
  }
  func.func @transform_2(%arg0: i32, %arg1: i32) -> (i32, i32) {
    %c0_i32 = arith.constant 0 : i32
    %c0_i32_0 = arith.constant 0 : i32
    return %arg0, %c0_i32 : i32, i32
  }
  func.func @transform_3(%arg0: i32, %arg1: i32) -> (i32, i32, i32) {
    %c0_i32 = arith.constant 0 : i32
    %c0_i32_0 = arith.constant 0 : i32
    return %arg1, %arg0, %c0_i32 : i32, i32, i32
  }
  func.func @transform_4(%arg0: i32, %arg1: i32) -> (i32, i32) {
    %c0_i32 = arith.constant 0 : i32
    %c0_i32_0 = arith.constant 0 : i32
    %c0_i32_1 = arith.constant 0 : i32
    return %c0_i32, %c0_i32_0 : i32, i32
  }
  func.func @transform_5(%arg0: i32, %arg1: i32) -> (i32, i32, i32) {
    %c0_i32 = arith.constant 0 : i32
    %c0_i32_0 = arith.constant 0 : i32
    return %arg1, %arg0, %c0_i32 : i32, i32, i32
  }
  func.func @transform_6(%arg0: i32, %arg1: i32) -> (i32, i32) {
    %c0_i32 = arith.constant 0 : i32
    %c0_i32_0 = arith.constant 0 : i32
    return %arg0, %c0_i32 : i32, i32
  }
  func.func @transform_7(%arg0: i32, %arg1: i32) -> (i32, i32) {
    %c0_i32 = arith.constant 0 : i32
    %c0_i32_0 = arith.constant 0 : i32
    return %arg0, %c0_i32 : i32, i32
  }
}

</mosaic_0001>

<llo_original>
// kernel: tpu_custom_call.1
$region0: #{tpu_custom_call.1}
  #allocation0 [shape = 'u32[]', space=smem, size = 0x4, offset = 0x4, fixed_abs, tag = 'smem constant byte address 0x4 - core index']
  #allocation1 [shape = 'u32[144,128]{1,0:T(1,128)}', space=vmem, size = 0x12000, scoped, tag = 'internal scratch']
  #allocation2 [shape = 'f32[8,32]{1,0:T(8,128)}', space=vmem, size = 0x1000, scoped, tag = 'scratch operand']
  #allocation3 [shape = 'f32[8,32]{1,0:T(8,128)}', space=vmem, size = 0x1000, scoped, tag = 'scratch operand']
  %s0 = inlined_call_operand.vmem [shape: s32[8,1], index: 0, kind: input, shape index: {}]
  %s1 = inlined_call_operand.vmem [shape: f32[8,32], index: 1, kind: input, shape index: {}]
  %s2 = inlined_call_operand.hbm [shape: f32[8,32], index: 2, kind: input, shape index: {}]
  %s3 = inlined_call_operand.hbm [shape: f32[8,8,128], index: 3, kind: input, shape index: {}]
  %s4 = inlined_call_operand.vmem [shape: bf16[32,128], index: 4, kind: input, shape index: {}]
  %s5 = inlined_call_operand.hbm [shape: f32[8,8,32], index: 5, kind: output, shape index: {0}]
  %s6 = inlined_call_operand.hbm [shape: f32[8,32], index: 6, kind: output, shape index: {1}]
  %s7 = inlined_call_operand.hbm [shape: f32[8,32], index: 7, kind: output, shape index: {2}]
  %8 = xla_tuple %s5, %s6, %s7
  %s9 = sld [smem:[#allocation0]]
  $region62: #{tpu_custom_call.1} parent=0
    _
  %s11 = ssub.s32 1, %s9
  %s12 = scalar_select 0, %s11, %s9
  $region1: #{tpu_custom_call.1} parent=0
    #allocation4 [shape = 'u8[4096]{0}', space=vmem, size = 0x1000, scoped, tag = 'input window, operand 2, single buffered']
    #allocation5 [shape = 's32[1]{0}', space=sflag, size = 0x4, scoped, tag = 'scoped memory for tpu_custom_call.1']
    #allocation6 [shape = 's32[1]{0}', space=sflag, size = 0x4, scoped, tag = 'scoped memory for tpu_custom_call.1']
    #allocation7 [shape = 'u8[32768]{0}', space=vmem, size = 0x8000, scoped, tag = 'input window, operand 3, single buffered']
    #allocation8 [shape = 's32[1]{0}', space=sflag, size = 0x4, scoped, tag = 'scoped memory for tpu_custom_call.1']
    #allocation9 [shape = 'u8[32768]{0}', space=vmem, size = 0x8000, scoped, tag = 'output window, operand 0, single buffered']
    #allocation10 [shape = 'u8[4096]{0}', space=vmem, size = 0x1000, scoped, tag = 'output window, operand 1, single buffered']
    #allocation11 [shape = 's32[1]{0}', space=sflag, size = 0x4, scoped, tag = 'scoped memory for tpu_custom_call.1']
    #allocation12 [shape = 'u8[4096]{0}', space=vmem, size = 0x1000, scoped, tag = 'output window, operand 2, single buffered']
    %13 = vsyncpa [#allocation5], 0
    %14 = vsyncpa [#allocation8], 0
    %15 = vsyncpa [#allocation6], 0
    %16 = vsyncpa [#allocation11], 0
    // Predicated region
    $region2: #{tpu_custom_call.1} parent=1 // pred_check
      _
    $region3: #{tpu_custom_call.1} parent=1 // pred_check_branch
      %18 = sbr.rel (0) target = $region5
    $region4: #{tpu_custom_call.1} parent=1 // pred_region
      _
    $region5: #{tpu_custom_call.1} parent=1 // pred_fallthru
      _
    // Predicated region
    $region6: #{tpu_custom_call.1} parent=1 // pred_check
      _
    $region7: #{tpu_custom_call.1} parent=1 // pred_check_branch
      %20 = sbr.rel (0) target = $region9
    $region8: #{tpu_custom_call.1} parent=1 // pred_region
      _
    $region9: #{tpu_custom_call.1} parent=1 // pred_fallthru
      _
    // Predicated region
    $region10: #{tpu_custom_call.1} parent=1 // pred_check
      _
    $region11: #{tpu_custom_call.1} parent=1 // pred_check_branch
      %22 = sbr.rel (0) target = $region13
    $region12: #{tpu_custom_call.1} parent=1 // pred_region
      %s24 = ssub.s32 128, 128
      %25 = vsyncadd [#allocation5], %s24
      %s27 = sshll.u32 [#allocation4], 4
      %s28 = int_to_ptr.vmem [resolvable:$true] %s27
      %30 = dma.hbm_to_vmem [thread:$0]  %s2, 128, %s28, [#allocation5]
    $region13: #{tpu_custom_call.1} parent=1 // pred_fallthru
      _
    // Predicated region
    $region14: #{tpu_custom_call.1} parent=1 // pred_check
      _
    $region15: #{tpu_custom_call.1} parent=1 // pred_check_branch
      %32 = sbr.rel (0) target = $region17
    $region16: #{tpu_custom_call.1} parent=1 // pred_region
      %s34 = ssub.s32 1024, 1024
      %35 = vsyncadd [#allocation8], %s34
      %s36 = sshll.u32 [#allocation7], 4
      %s37 = int_to_ptr.vmem [resolvable:$true] %s36
      %42 = dma.hbm_to_vmem [thread:$0]  %s3, 1024, %s37, [#allocation8], 128, 128, 8
    $region17: #{tpu_custom_call.1} parent=1 // pred_fallthru
      _
    // Predicated region
    $region18: #{tpu_custom_call.1} parent=1 // pred_check
      _
    $region19: #{tpu_custom_call.1} parent=1 // pred_check_branch
      %44 = sbr.rel (0) target = $region21
    $region20: #{tpu_custom_call.1} parent=1 // pred_region
      _
    $region21: #{tpu_custom_call.1} parent=1 // pred_fallthru
      _
    // Predicated region
    $region22: #{tpu_custom_call.1} parent=1 // pred_check
      _
    $region23: #{tpu_custom_call.1} parent=1 // pred_check_branch
      %46 = sbr.rel (0) target = $region25
    $region24: #{tpu_custom_call.1} parent=1 // pred_region
      %47 = dma.done [#allocation5], 128
    $region25: #{tpu_custom_call.1} parent=1 // pred_fallthru
      _
    // Predicated region
    $region26: #{tpu_custom_call.1} parent=1 // pred_check
      _
    $region27: #{tpu_custom_call.1} parent=1 // pred_check_branch
      %49 = sbr.rel (0) target = $region29
    $region28: #{tpu_custom_call.1} parent=1 // pred_region
      %50 = dma.done [#allocation8], 1024
    $region29: #{tpu_custom_call.1} parent=1 // pred_fallthru
      _
    %p52 = scmp.eq.s32.totalorder 0, 0
    // Predicated region
    $region30: #{tpu_custom_call.1} parent=1 // pred_check
      %p53 = pneg %p52
    $region31: #{tpu_custom_call.1} parent=1 // pred_check_branch
      %55 = sbr.rel (%p53) target = $region33
    $region32: #{tpu_custom_call.1} parent=1 // pred_region
      %v56 = vld [vmem:[%s1] sm:$0xff]
      %vm57 = vcmask 261120
      %58 = vst.msk [vmem:[#allocation2] sm:$0xff] %vm57, %v56
      %v59 = vld [vmem:[#allocation4] sm:$0xff]
      %60 = vst.msk [vmem:[#allocation3] sm:$0xff] %vm57, %v59
    $region33: #{tpu_custom_call.1} parent=1 // pred_fallthru
      _
    %v61 = vld [vmem:[%s0] sm:$0xff]
    %v62 = vld [vmem:[%s4] sm:$0xf]
    %v63 = vld [vmem:[%s4 + $0x4] sm:$0xf]
    %v64 = vld [vmem:[%s4 + $0x8] sm:$0xf]
    %v65 = vld [vmem:[%s4 + $0xc] sm:$0xf]
    %s66 = smul.u32 0, 8
    %v67 = vld [vmem:[#allocation2] sm:$0xff]
    %v68 = vld [vmem:[#allocation3] sm:$0xff]
    %v69 = vld [vmem:[#allocation7] sm:$0xff]
    %v70 = vpack.c.bf16 %v67, %v67
    %v75 = vunpack.c.l.b16 %v62
    %v76 = vunpack.c.l.b16 %v63
    %v77 = vunpack.c.l.b16 %v64
    %v78 = vunpack.c.l.b16 %v65
    %v79 = vpack.c.b16 %v76, %v75
    %v80 = vpack.c.b16 %v78, %v77
    %vm83 = vcmask 261120
    %v85 = vsel %vm83, %v70, 0
    %87 = vmatprep.subr.bf16.mxu0 0
    %88 = vmatpush1.bf16.msra.mxu0 %v79
    %89 = vmatprep.subr.bf16.mxu0 0
    %90 = vmatpush1.bf16.msra.mxu0 %v80
    %91 = vmatprep.subr.bf16.mxu0 0
    %92 = vmatpush1.bf16.msra.mxu0 0
    %93 = vmatprep.subr.bf16.mxu0 0
    %94 = vmatpush1.bf16.msra.mxu0 0
    %95 = vmatprep.subr.bf16.mxu0 0
    %96 = vmatpush1.bf16.msra.mxu0 0
    %97 = vmatprep.subr.bf16.mxu0 0
    %98 = vmatpush1.bf16.msra.mxu0 0
    %99 = vmatprep.subr.bf16.mxu0 0
    %100 = vmatpush1.bf16.msra.mxu0 0
    %101 = vmatprep.subr.bf16.mxu0 0
    %102 = vmatpush1.bf16.msra.mxu0 0
    %103 = vmatprep.subr.bf16.mxu0 0
    %104 = vmatpush1.bf16.msra.mxu0 0
    %105 = vmatprep.subr.bf16.mxu0 0
    %106 = vmatpush1.bf16.msra.mxu0 0
    %107 = vmatprep.subr.bf16.mxu0 0
    %108 = vmatpush1.bf16.msra.mxu0 0
    %109 = vmatprep.subr.bf16.mxu0 0
    %110 = vmatpush1.bf16.msra.mxu0 0
    %111 = vmatprep.subr.bf16.mxu0 0
    %112 = vmatpush1.bf16.msra.mxu0 0
    %113 = vmatprep.subr.bf16.mxu0 0
    %114 = vmatpush1.bf16.msra.mxu0 0
    %115 = vmatprep.subr.bf16.mxu0 0
    %116 = vmatpush1.bf16.msra.mxu0 0
    %117 = vmatprep.subr.bf16.mxu0 0
    %118 = vmatpush1.bf16.msra.mxu0 0
    %119 = vmatprep.mubr.bf16.mxu0 0
    %120 = vmatmul.mubr.bf16.gmra.mrb[0].mxu0 %v85
    %v121 = vpop.f32.mrb[0].mxu0
    %v122 = vadd.f32 0.0, %v121
    %v123 = vpop.f32.mrb[0].mxu0
    %v124 = vpop.f32.mrb[0].mxu0
    %v125 = vpop.f32.mrb[0].mxu0
    %126 = vdwg.mxu0
    %v127 = vadd.f32 %v69, %v122
    %v128 = vxor.u32 %v127, 2147483648
    %v129 = vmul.f32 %v128, 1.442695
    %v130 = vpow.pop %v129
    %v131 = vadd.f32 %v130, 1.0
    %v132 = vrcp.pop %v131
    %v133 = vmul.f32 1.0, %v132
    %v134 = vtanh.pop %v127
    %136 = vrot.lane.b32.xlu0 %v68, 32
    %v137 = vpop.permute.xlu0 %136
    %v139 = vmul.f32 %v133, %v137
    %141 = vrot.lane.b32.xlu0 %v134, 64
    %v142 = vpop.permute.xlu0 %141
    %v144 = vmul.f32 %v133, %v142
    %146 = vrot.lane.b32.xlu0 %v144, 32
    %v147 = vpop.permute.xlu0 %146
    %v149 = vadd.f32 %v139, %v147
    %v150 = vtanh.pop %v149
    %152 = vrot.lane.b32.xlu0 %v150, 64
    %v153 = vpop.permute.xlu0 %152
    %v155 = vmul.f32 %v133, %v153
    %v156 = vstv %s66
    %vm157 = vcmp.lt.s32.totalorder %v156, %v61
    %v158 = vsel %vm157, 1, 0
    %159 = vset.pattern.permute.xlu0 0
    %160 = vperm.xlu0 %159, %v158
    %v161 = vpop.permute.xlu0 %160
    %vm162 = vcmp.eq.s32.totalorder %v161, 1
    %v163 = vsel %vm162, %v155, 0.0
    %165 = vrot.lane.b32.xlu0 %v163, 32
    %v166 = vpop.permute.xlu0 %165
    %168 = vst.msk [vmem:[#allocation9] sm:$0xff] %vm83, %v166
    %170 = vrot.lane.b32.xlu0 %v67, 96
    %v171 = vpop.permute.xlu0 %170
    %v173 = vsel %vm162, %v155, %v171
    %v174 = vsel %vm162, %v149, %v137
    %s175 = scalar_lea.vmem [#allocation7], 8
    %v176 = vld [vmem:[%s175] sm:$0xff]
    %v177 = vpack.c.bf16 %v173, %v173
    %179 = vrot.lane.b32.xlu0 %v177, 32
    %v180 = vpop.permute.xlu0 %179
    %v182 = vsel %vm83, %v180, 0
    %184 = vmatprep.subr.bf16.mxu0 0
    %185 = vmatpush1.bf16.msra.mxu0 %v79
    %186 = vmatprep.subr.bf16.mxu0 0
    %187 = vmatpush1.bf16.msra.mxu0 %v80
    %188 = vmatprep.subr.bf16.mxu0 0
    %189 = vmatpush1.bf16.msra.mxu0 0
    %190 = vmatprep.subr.bf16.mxu0 0
    %191 = vmatpush1.bf16.msra.mxu0 0
    %192 = vmatprep.subr.bf16.mxu0 0
    %193 = vmatpush1.bf16.msra.mxu0 0
    %194 = vmatprep.subr.bf16.mxu0 0
    %195 = vmatpush1.bf16.msra.mxu0 0
    %196 = vmatprep.subr.bf16.mxu0 0
    %197 = vmatpush1.bf16.msra.mxu0 0
    %198 = vmatprep.subr.bf16.mxu0 0
    %199 = vmatpush1.bf16.msra.mxu0 0
    %200 = vmatprep.subr.bf16.mxu0 0
    %201 = vmatpush1.bf16.msra.mxu0 0
    %202 = vmatprep.subr.bf16.mxu0 0
    %203 = vmatpush1.bf16.msra.mxu0 0
    %204 = vmatprep.subr.bf16.mxu0 0
    %205 = vmatpush1.bf16.msra.mxu0 0
    %206 = vmatprep.subr.bf16.mxu0 0
    %207 = vmatpush1.bf16.msra.mxu0 0
    %208 = vmatprep.subr.bf16.mxu0 0
    %209 = vmatpush1.bf16.msra.mxu0 0
    %210 = vmatprep.subr.bf16.mxu0 0
    %211 = vmatpush1.bf16.msra.mxu0 0
    %212 = vmatprep.subr.bf16.mxu0 0
    %213 = vmatpush1.bf16.msra.mxu0 0
    %214 = vmatprep.subr.bf16.mxu0 0
    %215 = vmatpush1.bf16.msra.mxu0 0
    %216 = vmatprep.mubr.bf16.mxu0 0
    %217 = vmatmul.mubr.bf16.gmra.mrb[0].mxu0 %v182
    %v218 = vpop.f32.mrb[0].mxu0
    %v219 = vadd.f32 0.0, %v218
    %v220 = vpop.f32.mrb[0].mxu0
    %v221 = vpop.f32.mrb[0].mxu0
    %v222 = vpop.f32.mrb[0].mxu0
    %223 = vdwg.mxu0
    %v224 = vadd.f32 %v176, %v219
    %v225 = vxor.u32 %v224, 2147483648
    %v226 = vmul.f32 %v225, 1.442695
    %v227 = vpow.pop %v226
    %v228 = vadd.f32 %v227, 1.0
    %v229 = vrcp.pop %v228
    %v230 = vmul.f32 1.0, %v229
    %v231 = vtanh.pop %v224
    %v232 = vmul.f32 %v230, %v174
    %234 = vrot.lane.b32.xlu0 %v231, 64
    %v235 = vpop.permute.xlu0 %234
    %v237 = vmul.f32 %v230, %v235
    %239 = vrot.lane.b32.xlu0 %v237, 32
    %v240 = vpop.permute.xlu0 %239
    %v242 = vadd.f32 %v232, %v240
    %v243 = vtanh.pop %v242
    %245 = vrot.lane.b32.xlu0 %v243, 64
    %v246 = vpop.permute.xlu0 %245
    %v248 = vmul.f32 %v230, %v246
    %s249 = sadd.s32 %s66, 1
    %v250 = vstv %s249
    %vm251 = vcmp.lt.s32.totalorder %v250, %v61
    %v252 = vsel %vm251, 1, 0
    %253 = vset.pattern.permute.xlu0 0
    %254 = vperm.xlu0 %253, %v252
    %v255 = vpop.permute.xlu0 %254
    %vm256 = vcmp.eq.s32.totalorder %v255, 1
    %v257 = vsel %vm256, %v248, 0.0
    %259 = vrot.lane.b32.xlu0 %v257, 32
    %v260 = vpop.permute.xlu0 %259
    %s262 = scalar_lea.vmem [#allocation9], 8
    %263 = vst.msk [vmem:[%s262] sm:$0xff] %vm83, %v260
    %v264 = vsel %vm256, %v248, %v173
    %v265 = vsel %vm256, %v242, %v174
    %s266 = scalar_lea.vmem [#allocation7], 16
    %v267 = vld [vmem:[%s266] sm:$0xff]
    %v268 = vpack.c.bf16 %v264, %v264
    %270 = vrot.lane.b32.xlu0 %v268, 32
    %v271 = vpop.permute.xlu0 %270
    %v273 = vsel %vm83, %v271, 0
    %275 = vmatprep.subr.bf16.mxu0 0
    %276 = vmatpush1.bf16.msra.mxu0 %v79
    %277 = vmatprep.subr.bf16.mxu0 0
    %278 = vmatpush1.bf16.msra.mxu0 %v80
    %279 = vmatprep.subr.bf16.mxu0 0
    %280 = vmatpush1.bf16.msra.mxu0 0
    %281 = vmatprep.subr.bf16.mxu0 0
    %282 = vmatpush1.bf16.msra.mxu0 0
    %283 = vmatprep.subr.bf16.mxu0 0
    %284 = vmatpush1.bf16.msra.mxu0 0
    %285 = vmatprep.subr.bf16.mxu0 0
    %286 = vmatpush1.bf16.msra.mxu0 0
    %287 = vmatprep.subr.bf16.mxu0 0
    %288 = vmatpush1.bf16.msra.mxu0 0
    %289 = vmatprep.subr.bf16.mxu0 0
    %290 = vmatpush1.bf16.msra.mxu0 0
    %291 = vmatprep.subr.bf16.mxu0 0
    %292 = vmatpush1.bf16.msra.mxu0 0
    %293 = vmatprep.subr.bf16.mxu0 0
    %294 = vmatpush1.bf16.msra.mxu0 0
    %295 = vmatprep.subr.bf16.mxu0 0
    %296 = vmatpush1.bf16.msra.mxu0 0
    %297 = vmatprep.subr.bf16.mxu0 0
    %298 = vmatpush1.bf16.msra.mxu0 0
    %299 = vmatprep.subr.bf16.mxu0 0
    %300 = vmatpush1.bf16.msra.mxu0 0
    %301 = vmatprep.subr.bf16.mxu0 0
    %302 = vmatpush1.bf16.msra.mxu0 0
    %303 = vmatprep.subr.bf16.mxu0 0
    %304 = vmatpush1.bf16.msra.mxu0 0
    %305 = vmatprep.subr.bf16.mxu0 0
    %306 = vmatpush1.bf16.msra.mxu0 0
    %307 = vmatprep.mubr.bf16.mxu0 0
    %308 = vmatmul.mubr.bf16.gmra.mrb[0].mxu0 %v273
    %v309 = vpop.f32.mrb[0].mxu0
    %v310 = vadd.f32 0.0, %v309
    %v311 = vpop.f32.mrb[0].mxu0
    %v312 = vpop.f32.mrb[0].mxu0
    %v313 = vpop.f32.mrb[0].mxu0
    %314 = vdwg.mxu0
    %v315 = vadd.f32 %v267, %v310
    %v316 = vxor.u32 %v315, 2147483648
    %v317 = vmul.f32 %v316, 1.442695
    %v318 = vpow.pop %v317
    %v319 = vadd.f32 %v318, 1.0
    %v320 = vrcp.pop %v319
    %v321 = vmul.f32 1.0, %v320
    %v322 = vtanh.pop %v315
    %v323 = vmul.f32 %v321, %v265
    %325 = vrot.lane.b32.xlu0 %v322, 64
    %v326 = vpop.permute.xlu0 %325
    %v328 = vmul.f32 %v321, %v326
    %330 = vrot.lane.b32.xlu0 %v328, 32
    %v331 = vpop.permute.xlu0 %330
    %v333 = vadd.f32 %v323, %v331
    %v334 = vtanh.pop %v333
    %336 = vrot.lane.b32.xlu0 %v334, 64
    %v337 = vpop.permute.xlu0 %336
    %v339 = vmul.f32 %v321, %v337
    %s340 = sadd.s32 %s66, 2
    %v341 = vstv %s340
    %vm342 = vcmp.lt.s32.totalorder %v341, %v61
    %v343 = vsel %vm342, 1, 0
    %344 = vset.pattern.permute.xlu0 0
    %345 = vperm.xlu0 %344, %v343
    %v346 = vpop.permute.xlu0 %345
    %vm347 = vcmp.eq.s32.totalorder %v346, 1
    %v348 = vsel %vm347, %v339, 0.0
    %350 = vrot.lane.b32.xlu0 %v348, 32
    %v351 = vpop.permute.xlu0 %350
    %s353 = scalar_lea.vmem [#allocation9], 16
    %354 = vst.msk [vmem:[%s353] sm:$0xff] %vm83, %v351
    %v355 = vsel %vm347, %v339, %v264
    %v356 = vsel %vm347, %v333, %v265
    %s357 = scalar_lea.vmem [#allocation7], 24
    %v358 = vld [vmem:[%s357] sm:$0xff]
    %v359 = vpack.c.bf16 %v355, %v355
    %361 = vrot.lane.b32.xlu0 %v359, 32
    %v362 = vpop.permute.xlu0 %361
    %v364 = vsel %vm83, %v362, 0
    %366 = vmatprep.subr.bf16.mxu0 0
    %367 = vmatpush1.bf16.msra.mxu0 %v79
    %368 = vmatprep.subr.bf16.mxu0 0
    %369 = vmatpush1.bf16.msra.mxu0 %v80
    %370 = vmatprep.subr.bf16.mxu0 0
    %371 = vmatpush1.bf16.msra.mxu0 0
    %372 = vmatprep.subr.bf16.mxu0 0
    %373 = vmatpush1.bf16.msra.mxu0 0
    %374 = vmatprep.subr.bf16.mxu0 0
    %375 = vmatpush1.bf16.msra.mxu0 0
    %376 = vmatprep.subr.bf16.mxu0 0
    %377 = vmatpush1.bf16.msra.mxu0 0
    %378 = vmatprep.subr.bf16.mxu0 0
    %379 = vmatpush1.bf16.msra.mxu0 0
    %380 = vmatprep.subr.bf16.mxu0 0
    %381 = vmatpush1.bf16.msra.mxu0 0
    %382 = vmatprep.subr.bf16.mxu0 0
    %383 = vmatpush1.bf16.msra.mxu0 0
    %384 = vmatprep.subr.bf16.mxu0 0
    %385 = vmatpush1.bf16.msra.mxu0 0
    %386 = vmatprep.subr.bf16.mxu0 0
    %387 = vmatpush1.bf16.msra.mxu0 0
    %388 = vmatprep.subr.bf16.mxu0 0
    %389 = vmatpush1.bf16.msra.mxu0 0
    %390 = vmatprep.subr.bf16.mxu0 0
    %391 = vmatpush1.bf16.msra.mxu0 0
    %392 = vmatprep.subr.bf16.mxu0 0
    %393 = vmatpush1.bf16.msra.mxu0 0
    %394 = vmatprep.subr.bf16.mxu0 0
    %395 = vmatpush1.bf16.msra.mxu0 0
    %396 = vmatprep.subr.bf16.mxu0 0
    %397 = vmatpush1.bf16.msra.mxu0 0
    %398 = vmatprep.mubr.bf16.mxu0 0
    %399 = vmatmul.mubr.bf16.gmra.mrb[0].mxu0 %v364
    %v400 = vpop.f32.mrb[0].mxu0
    %v401 = vadd.f32 0.0, %v400
    %v402 = vpop.f32.mrb[0].mxu0
    %v403 = vpop.f32.mrb[0].mxu0
    %v404 = vpop.f32.mrb[0].mxu0
    %405 = vdwg.mxu0
    %v406 = vadd.f32 %v358, %v401
    %v407 = vxor.u32 %v406, 2147483648
    %v408 = vmul.f32 %v407, 1.442695
    %v409 = vpow.pop %v408
    %v410 = vadd.f32 %v409, 1.0
    %v411 = vrcp.pop %v410
    %v412 = vmul.f32 1.0, %v411
    %v413 = vtanh.pop %v406
    %v414 = vmul.f32 %v412, %v356
    %416 = vrot.lane.b32.xlu0 %v413, 64
    %v417 = vpop.permute.xlu0 %416
    %v419 = vmul.f32 %v412, %v417
    %421 = vrot.lane.b32.xlu0 %v419, 32
    %v422 = vpop.permute.xlu0 %421
    %v424 = vadd.f32 %v414, %v422
    %v425 = vtanh.pop %v424
    %427 = vrot.lane.b32.xlu0 %v425, 64
    %v428 = vpop.permute.xlu0 %427
    %v430 = vmul.f32 %v412, %v428
    %s431 = sadd.s32 %s66, 3
    %v432 = vstv %s431
    %vm433 = vcmp.lt.s32.totalorder %v432, %v61
    %v434 = vsel %vm433, 1, 0
    %435 = vset.pattern.permute.xlu0 0
    %436 = vperm.xlu0 %435, %v434
    %v437 = vpop.permute.xlu0 %436
    %vm438 = vcmp.eq.s32.totalorder %v437, 1
    %v439 = vsel %vm438, %v430, 0.0
    %441 = vrot.lane.b32.xlu0 %v439, 32
    %v442 = vpop.permute.xlu0 %441
    %s444 = scalar_lea.vmem [#allocation9], 24
    %445 = vst.msk [vmem:[%s444] sm:$0xff] %vm83, %v442
    %v446 = vsel %vm438, %v430, %v355
    %v447 = vsel %vm438, %v424, %v356
    %s448 = scalar_lea.vmem [#allocation7], 32
    %v449 = vld [vmem:[%s448] sm:$0xff]
    %v450 = vpack.c.bf16 %v446, %v446
    %452 = vrot.lane.b32.xlu0 %v450, 32
    %v453 = vpop.permute.xlu0 %452
    %v455 = vsel %vm83, %v453, 0
    %457 = vmatprep.subr.bf16.mxu0 0
    %458 = vmatpush1.bf16.msra.mxu0 %v79
    %459 = vmatprep.subr.bf16.mxu0 0
    %460 = vmatpush1.bf16.msra.mxu0 %v80
    %461 = vmatprep.subr.bf16.mxu0 0
    %462 = vmatpush1.bf16.msra.mxu0 0
    %463 = vmatprep.subr.bf16.mxu0 0
    %464 = vmatpush1.bf16.msra.mxu0 0
    %465 = vmatprep.subr.bf16.mxu0 0
    %466 = vmatpush1.bf16.msra.mxu0 0
    %467 = vmatprep.subr.bf16.mxu0 0
    %468 = vmatpush1.bf16.msra.mxu0 0
    %469 = vmatprep.subr.bf16.mxu0 0
    %470 = vmatpush1.bf16.msra.mxu0 0
    %471 = vmatprep.subr.bf16.mxu0 0
    %472 = vmatpush1.bf16.msra.mxu0 0
    %473 = vmatprep.subr.bf16.mxu0 0
    %474 = vmatpush1.bf16.msra.mxu0 0
    %475 = vmatprep.subr.bf16.mxu0 0
    %476 = vmatpush1.bf16.msra.mxu0 0
    %477 = vmatprep.subr.bf16.mxu0 0
    %478 = vmatpush1.bf16.msra.mxu0 0
    %479 = vmatprep.subr.bf16.mxu0 0
    %480 = vmatpush1.bf16.msra.mxu0 0
    %481 = vmatprep.subr.bf16.mxu0 0
    %482 = vmatpush1.bf16.msra.mxu0 0
    %483 = vmatprep.subr.bf16.mxu0 0
    %484 = vmatpush1.bf16.msra.mxu0 0
    %485 = vmatprep.subr.bf16.mxu0 0
    %486 = vmatpush1.bf16.msra.mxu0 0
    %487 = vmatprep.subr.bf16.mxu0 0
    %488 = vmatpush1.bf16.msra.mxu0 0
    %489 = vmatprep.mubr.bf16.mxu0 0
    %490 = vmatmul.mubr.bf16.gmra.mrb[0].mxu0 %v455
    %v491 = vpop.f32.mrb[0].mxu0
    %v492 = vadd.f32 0.0, %v491
    %v493 = vpop.f32.mrb[0].mxu0
    %v494 = vpop.f32.mrb[0].mxu0
    %v495 = vpop.f32.mrb[0].mxu0
    %496 = vdwg.mxu0
    %v497 = vadd.f32 %v449, %v492
    %v498 = vxor.u32 %v497, 2147483648
    %v499 = vmul.f32 %v498, 1.442695
    %v500 = vpow.pop %v499
    %v501 = vadd.f32 %v500, 1.0
    %v502 = vrcp.pop %v501
    %v503 = vmul.f32 1.0, %v502
    %v504 = vtanh.pop %v497
    %v505 = vmul.f32 %v503, %v447
    %507 = vrot.lane.b32.xlu0 %v504, 64
    %v508 = vpop.permute.xlu0 %507
    %v510 = vmul.f32 %v503, %v508
    %512 = vrot.lane.b32.xlu0 %v510, 32
    %v513 = vpop.permute.xlu0 %512
    %v515 = vadd.f32 %v505, %v513
    %v516 = vtanh.pop %v515
    %518 = vrot.lane.b32.xlu0 %v516, 64
    %v519 = vpop.permute.xlu0 %518
    %v521 = vmul.f32 %v503, %v519
    %s522 = sadd.s32 %s66, 4
    %v523 = vstv %s522
    %vm524 = vcmp.lt.s32.totalorder %v523, %v61
    %v525 = vsel %vm524, 1, 0
    %526 = vset.pattern.permute.xlu0 0
    %527 = vperm.xlu0 %526, %v525
    %v528 = vpop.permute.xlu0 %527
    %vm529 = vcmp.eq.s32.totalorder %v528, 1
    %v530 = vsel %vm529, %v521, 0.0
    %532 = vrot.lane.b32.xlu0 %v530, 32
    %v533 = vpop.permute.xlu0 %532
    %s535 = scalar_lea.vmem [#allocation9], 32
    %536 = vst.msk [vmem:[%s535] sm:$0xff] %vm83, %v533
    %v537 = vsel %vm529, %v521, %v446
    %v538 = vsel %vm529, %v515, %v447
    %s539 = scalar_lea.vmem [#allocation7], 40
    %v540 = vld [vmem:[%s539] sm:$0xff]
    %v541 = vpack.c.bf16 %v537, %v537
    %543 = vrot.lane.b32.xlu0 %v541, 32
    %v544 = vpop.permute.xlu0 %543
    %v546 = vsel %vm83, %v544, 0
    %548 = vmatprep.subr.bf16.mxu0 0
    %549 = vmatpush1.bf16.msra.mxu0 %v79
    %550 = vmatprep.subr.bf16.mxu0 0
    %551 = vmatpush1.bf16.msra.mxu0 %v80
    %552 = vmatprep.subr.bf16.mxu0 0
    %553 = vmatpush1.bf16.msra.mxu0 0
    %554 = vmatprep.subr.bf16.mxu0 0
    %555 = vmatpush1.bf16.msra.mxu0 0
    %556 = vmatprep.subr.bf16.mxu0 0
    %557 = vmatpush1.bf16.msra.mxu0 0
    %558 = vmatprep.subr.bf16.mxu0 0
    %559 = vmatpush1.bf16.msra.mxu0 0
    %560 = vmatprep.subr.bf16.mxu0 0
    %561 = vmatpush1.bf16.msra.mxu0 0
    %562 = vmatprep.subr.bf16.mxu0 0
    %563 = vmatpush1.bf16.msra.mxu0 0
    %564 = vmatprep.subr.bf16.mxu0 0
    %565 = vmatpush1.bf16.msra.mxu0 0
    %566 = vmatprep.subr.bf16.mxu0 0
    %567 = vmatpush1.bf16.msra.mxu0 0
    %568 = vmatprep.subr.bf16.mxu0 0
    %569 = vmatpush1.bf16.msra.mxu0 0
    %570 = vmatprep.subr.bf16.mxu0 0
    %571 = vmatpush1.bf16.msra.mxu0 0
    %572 = vmatprep.subr.bf16.mxu0 0
    %573 = vmatpush1.bf16.msra.mxu0 0
    %574 = vmatprep.subr.bf16.mxu0 0
    %575 = vmatpush1.bf16.msra.mxu0 0
    %576 = vmatprep.subr.bf16.mxu0 0
    %577 = vmatpush1.bf16.msra.mxu0 0
    %578 = vmatprep.subr.bf16.mxu0 0
    %579 = vmatpush1.bf16.msra.mxu0 0
    %580 = vmatprep.mubr.bf16.mxu0 0
    %581 = vmatmul.mubr.bf16.gmra.mrb[0].mxu0 %v546
    %v582 = vpop.f32.mrb[0].mxu0
    %v583 = vadd.f32 0.0, %v582
    %v584 = vpop.f32.mrb[0].mxu0
    %v585 = vpop.f32.mrb[0].mxu0
    %v586 = vpop.f32.mrb[0].mxu0
    %587 = vdwg.mxu0
    %v588 = vadd.f32 %v540, %v583
    %v589 = vxor.u32 %v588, 2147483648
    %v590 = vmul.f32 %v589, 1.442695
    %v591 = vpow.pop %v590
    %v592 = vadd.f32 %v591, 1.0
    %v593 = vrcp.pop %v592
    %v594 = vmul.f32 1.0, %v593
    %v595 = vtanh.pop %v588
    %v596 = vmul.f32 %v594, %v538
    %598 = vrot.lane.b32.xlu0 %v595, 64
    %v599 = vpop.permute.xlu0 %598
    %v601 = vmul.f32 %v594, %v599
    %603 = vrot.lane.b32.xlu0 %v601, 32
    %v604 = vpop.permute.xlu0 %603
    %v606 = vadd.f32 %v596, %v604
    %v607 = vtanh.pop %v606
    %609 = vrot.lane.b32.xlu0 %v607, 64
    %v610 = vpop.permute.xlu0 %609
    %v612 = vmul.f32 %v594, %v610
    %s613 = sadd.s32 %s66, 5
    %v614 = vstv %s613
    %vm615 = vcmp.lt.s32.totalorder %v614, %v61
    %v616 = vsel %vm615, 1, 0
    %617 = vset.pattern.permute.xlu0 0
    %618 = vperm.xlu0 %617, %v616
    %v619 = vpop.permute.xlu0 %618
    %vm620 = vcmp.eq.s32.totalorder %v619, 1
    %v621 = vsel %vm620, %v612, 0.0
    %623 = vrot.lane.b32.xlu0 %v621, 32
    %v624 = vpop.permute.xlu0 %623
    %s626 = scalar_lea.vmem [#allocation9], 40
    %627 = vst.msk [vmem:[%s626] sm:$0xff] %vm83, %v624
    %v628 = vsel %vm620, %v612, %v537
    %v629 = vsel %vm620, %v606, %v538
    %s630 = scalar_lea.vmem [#allocation7], 48
    %v631 = vld [vmem:[%s630] sm:$0xff]
    %v632 = vpack.c.bf16 %v628, %v628
    %634 = vrot.lane.b32.xlu0 %v632, 32
    %v635 = vpop.permute.xlu0 %634
    %v637 = vsel %vm83, %v635, 0
    %639 = vmatprep.subr.bf16.mxu0 0
    %640 = vmatpush1.bf16.msra.mxu0 %v79
    %641 = vmatprep.subr.bf16.mxu0 0
    %642 = vmatpush1.bf16.msra.mxu0 %v80
    %643 = vmatprep.subr.bf16.mxu0 0
    %644 = vmatpush1.bf16.msra.mxu0 0
    %645 = vmatprep.subr.bf16.mxu0 0
    %646 = vmatpush1.bf16.msra.mxu0 0
    %647 = vmatprep.subr.bf16.mxu0 0
    %648 = vmatpush1.bf16.msra.mxu0 0
    %649 = vmatprep.subr.bf16.mxu0 0
    %650 = vmatpush1.bf16.msra.mxu0 0
    %651 = vmatprep.subr.bf16.mxu0 0
    %652 = vmatpush1.bf16.msra.mxu0 0
    %653 = vmatprep.subr.bf16.mxu0 0
    %654 = vmatpush1.bf16.msra.mxu0 0
    %655 = vmatprep.subr.bf16.mxu0 0
    %656 = vmatpush1.bf16.msra.mxu0 0
    %657 = vmatprep.subr.bf16.mxu0 0
    %658 = vmatpush1.bf16.msra.mxu0 0
    %659 = vmatprep.subr.bf16.mxu0 0
    %660 = vmatpush1.bf16.msra.mxu0 0
    %661 = vmatprep.subr.bf16.mxu0 0
    %662 = vmatpush1.bf16.msra.mxu0 0
    %663 = vmatprep.subr.bf16.mxu0 0
    %664 = vmatpush1.bf16.msra.mxu0 0
    %665 = vmatprep.subr.bf16.mxu0 0
    %666 = vmatpush1.bf16.msra.mxu0 0
    %667 = vmatprep.subr.bf16.mxu0 0
    %668 = vmatpush1.bf16.msra.mxu0 0
    %669 = vmatprep.subr.bf16.mxu0 0
    %670 = vmatpush1.bf16.msra.mxu0 0
    %671 = vmatprep.mubr.bf16.mxu0 0
    %672 = vmatmul.mubr.bf16.gmra.mrb[0].mxu0 %v637
    %v673 = vpop.f32.mrb[0].mxu0
    %v674 = vadd.f32 0.0, %v673
    %v675 = vpop.f32.mrb[0].mxu0
    %v676 = vpop.f32.mrb[0].mxu0
    %v677 = vpop.f32.mrb[0].mxu0
    %678 = vdwg.mxu0
    %v679 = vadd.f32 %v631, %v674
    %v680 = vxor.u32 %v679, 2147483648
    %v681 = vmul.f32 %v680, 1.442695
    %v682 = vpow.pop %v681
    %v683 = vadd.f32 %v682, 1.0
    %v684 = vrcp.pop %v683
    %v685 = vmul.f32 1.0, %v684
    %v686 = vtanh.pop %v679
    %v687 = vmul.f32 %v685, %v629
    %689 = vrot.lane.b32.xlu0 %v686, 64
    %v690 = vpop.permute.xlu0 %689
    %v692 = vmul.f32 %v685, %v690
    %694 = vrot.lane.b32.xlu0 %v692, 32
    %v695 = vpop.permute.xlu0 %694
    %v697 = vadd.f32 %v687, %v695
    %v698 = vtanh.pop %v697
    %700 = vrot.lane.b32.xlu0 %v698, 64
    %v701 = vpop.permute.xlu0 %700
    %v703 = vmul.f32 %v685, %v701
    %s704 = sadd.s32 %s66, 6
    %v705 = vstv %s704
    %vm706 = vcmp.lt.s32.totalorder %v705, %v61
    %v707 = vsel %vm706, 1, 0
    %708 = vset.pattern.permute.xlu0 0
    %709 = vperm.xlu0 %708, %v707
    %v710 = vpop.permute.xlu0 %709
    %vm711 = vcmp.eq.s32.totalorder %v710, 1
    %v712 = vsel %vm711, %v703, 0.0
    %714 = vrot.lane.b32.xlu0 %v712, 32
    %v715 = vpop.permute.xlu0 %714
    %s717 = scalar_lea.vmem [#allocation9], 48
    %718 = vst.msk [vmem:[%s717] sm:$0xff] %vm83, %v715
    %v719 = vsel %vm711, %v703, %v628
    %v720 = vsel %vm711, %v697, %v629
    %s721 = scalar_lea.vmem [#allocation7], 56
    %v722 = vld [vmem:[%s721] sm:$0xff]
    %v723 = vpack.c.bf16 %v719, %v719
    %725 = vrot.lane.b32.xlu0 %v723, 32
    %v726 = vpop.permute.xlu0 %725
    %v728 = vsel %vm83, %v726, 0
    %730 = vmatprep.subr.bf16.mxu0 0
    %731 = vmatpush1.bf16.msra.mxu0 %v79
    %732 = vmatprep.subr.bf16.mxu0 0
    %733 = vmatpush1.bf16.msra.mxu0 %v80
    %734 = vmatprep.subr.bf16.mxu0 0
    %735 = vmatpush1.bf16.msra.mxu0 0
    %736 = vmatprep.subr.bf16.mxu0 0
    %737 = vmatpush1.bf16.msra.mxu0 0
    %738 = vmatprep.subr.bf16.mxu0 0
    %739 = vmatpush1.bf16.msra.mxu0 0
    %740 = vmatprep.subr.bf16.mxu0 0
    %741 = vmatpush1.bf16.msra.mxu0 0
    %742 = vmatprep.subr.bf16.mxu0 0
    %743 = vmatpush1.bf16.msra.mxu0 0
    %744 = vmatprep.subr.bf16.mxu0 0
    %745 = vmatpush1.bf16.msra.mxu0 0
    %746 = vmatprep.subr.bf16.mxu0 0
    %747 = vmatpush1.bf16.msra.mxu0 0
    %748 = vmatprep.subr.bf16.mxu0 0
    %749 = vmatpush1.bf16.msra.mxu0 0
    %750 = vmatprep.subr.bf16.mxu0 0
    %751 = vmatpush1.bf16.msra.mxu0 0
    %752 = vmatprep.subr.bf16.mxu0 0
    %753 = vmatpush1.bf16.msra.mxu0 0
    %754 = vmatprep.subr.bf16.mxu0 0
    %755 = vmatpush1.bf16.msra.mxu0 0
    %756 = vmatprep.subr.bf16.mxu0 0
    %757 = vmatpush1.bf16.msra.mxu0 0
    %758 = vmatprep.subr.bf16.mxu0 0
    %759 = vmatpush1.bf16.msra.mxu0 0
    %760 = vmatprep.subr.bf16.mxu0 0
    %761 = vmatpush1.bf16.msra.mxu0 0
    %762 = vmatprep.mubr.bf16.mxu0 0
    %763 = vmatmul.mubr.bf16.gmra.mrb[0].mxu0 %v728
    %v764 = vpop.f32.mrb[0].mxu0
    %v765 = vadd.f32 0.0, %v764
    %v766 = vpop.f32.mrb[0].mxu0
    %v767 = vpop.f32.mrb[0].mxu0
    %v768 = vpop.f32.mrb[0].mxu0
    %769 = vdwg.mxu0
    %v770 = vadd.f32 %v722, %v765
    %v771 = vxor.u32 %v770, 2147483648
    %v772 = vmul.f32 %v771, 1.442695
    %v773 = vpow.pop %v772
    %v774 = vadd.f32 %v773, 1.0
    %v775 = vrcp.pop %v774
    %v776 = vmul.f32 1.0, %v775
    %v777 = vtanh.pop %v770
    %v778 = vmul.f32 %v776, %v720
    %780 = vrot.lane.b32.xlu0 %v777, 64
    %v781 = vpop.permute.xlu0 %780
    %v783 = vmul.f32 %v776, %v781
    %785 = vrot.lane.b32.xlu0 %v783, 32
    %v786 = vpop.permute.xlu0 %785
    %v788 = vadd.f32 %v778, %v786
    %v789 = vtanh.pop %v788
    %791 = vrot.lane.b32.xlu0 %v789, 64
    %v792 = vpop.permute.xlu0 %791
    %v794 = vmul.f32 %v776, %v792
    %s795 = sadd.s32 %s66, 7
    %v796 = vstv %s795
    %vm797 = vcmp.lt.s32.totalorder %v796, %v61
    %v798 = vsel %vm797, 1, 0
    %799 = vset.pattern.permute.xlu0 0
    %800 = vperm.xlu0 %799, %v798
    %v801 = vpop.permute.xlu0 %800
    %vm802 = vcmp.eq.s32.totalorder %v801, 1
    %v803 = vsel %vm802, %v794, 0.0
    %805 = vrot.lane.b32.xlu0 %v803, 32
    %v806 = vpop.permute.xlu0 %805
    %s808 = scalar_lea.vmem [#allocation9], 56
    %809 = vst.msk [vmem:[%s808] sm:$0xff] %vm83, %v806
    %v810 = vsel %vm802, %v794, %v719
    %v811 = vsel %vm802, %v788, %v720
    %813 = vrot.lane.b32.xlu0 %v810, 32
    %v814 = vpop.permute.xlu0 %813
    %816 = vst.msk [vmem:[#allocation2] sm:$0xff] %vm83, %v814
    %818 = vrot.lane.b32.xlu0 %v811, 96
    %v819 = vpop.permute.xlu0 %818
    %821 = vst.msk [vmem:[#allocation3] sm:$0xff] %vm83, %v819
    // Predicated region
    $region34: #{tpu_custom_call.1} parent=1 // pred_check
      %p822 = pneg %p52
    $region35: #{tpu_custom_call.1} parent=1 // pred_check_branch
      %824 = sbr.rel (%p822) target = $region37
    $region36: #{tpu_custom_call.1} parent=1 // pred_region
      %825 = vst.msk [vmem:[#allocation10] sm:$0xff] %vm83, %v814
      %826 = vst.msk [vmem:[#allocation12] sm:$0xff] %vm83, %v819
    $region37: #{tpu_custom_call.1} parent=1 // pred_fallthru
      _
    // Predicated region
    $region38: #{tpu_custom_call.1} parent=1 // pred_check
      _
    $region39: #{tpu_custom_call.1} parent=1 // pred_check_branch
      %828 = sbr.rel (0) target = $region41
    $region40: #{tpu_custom_call.1} parent=1 // pred_region
      %s830 = ssub.s32 1024, 1024
      %831 = vsyncadd [#allocation6], %s830
      %s832 = sshll.u32 [#allocation9], 4
      %s833 = int_to_ptr.vmem [resolvable:$true] %s832
      %838 = dma.vmem_to_hbm [thread:$0]  %s833, 1024, %s5, [#allocation6], 128, 128, 8
    $region41: #{tpu_custom_call.1} parent=1 // pred_fallthru
      _
    // Predicated region
    $region42: #{tpu_custom_call.1} parent=1 // pred_check
      _
    $region43: #{tpu_custom_call.1} parent=1 // pred_check_branch
      %840 = sbr.rel (0) target = $region45
    $region44: #{tpu_custom_call.1} parent=1 // pred_region
      %s842 = ssub.s32 128, 128
      %843 = vsyncadd [#allocation11], %s842
      %s845 = sshll.u32 [#allocation10], 4
      %s846 = int_to_ptr.vmem [resolvable:$true] %s845
      %848 = dma.vmem_to_hbm [thread:$0]  %s846, 128, %s6, [#allocation11]
    $region45: #{tpu_custom_call.1} parent=1 // pred_fallthru
      _
    // Predicated region
    $region46: #{tpu_custom_call.1} parent=1 // pred_check
      _
    $region47: #{tpu_custom_call.1} parent=1 // pred_check_branch
      %850 = sbr.rel (0) target = $region49
    $region48: #{tpu_custom_call.1} parent=1 // pred_region
      %s852 = ssub.s32 128, 128
      %853 = vsyncadd [#allocation11], %s852
      %s855 = sshll.u32 [#allocation12], 4
      %s856 = int_to_ptr.vmem [resolvable:$true] %s855
      %858 = dma.vmem_to_hbm [thread:$0]  %s856, 128, %s7, [#allocation11]
    $region49: #{tpu_custom_call.1} parent=1 // pred_fallthru
      _
    // Predicated region
    $region50: #{tpu_custom_call.1} parent=1 // pred_check
      _
    $region51: #{tpu_custom_call.1} parent=1 // pred_check_branch
      %860 = sbr.rel (0) target = $region53
    $region52: #{tpu_custom_call.1} parent=1 // pred_region
      %861 = dma.done [#allocation6], 1024
    $region53: #{tpu_custom_call.1} parent=1 // pred_fallthru
      _
    // Predicated region
    $region54: #{tpu_custom_call.1} parent=1 // pred_check
      _
    $region55: #{tpu_custom_call.1} parent=1 // pred_check_branch
      %863 = sbr.rel (0) target = $region57
    $region56: #{tpu_custom_call.1} parent=1 // pred_region
      %864 = dma.done [#allocation11], 128
    $region57: #{tpu_custom_call.1} parent=1 // pred_fallthru
      _
    // Predicated region
    $region58: #{tpu_custom_call.1} parent=1 // pred_check
      _
    $region59: #{tpu_custom_call.1} parent=1 // pred_check_branch
      %866 = sbr.rel (0) target = $region61
    $region60: #{tpu_custom_call.1} parent=1 // pred_region
      %867 = dma.done [#allocation11], 128
    $region61: #{tpu_custom_call.1} parent=1 // pred_fallthru
      _
    %868 = vsyncpa [#allocation5], 1
    %869 = vsyncpa [#allocation8], 1
    %870 = vsyncpa [#allocation6], 1
    %871 = vsyncpa [#allocation11], 1

</llo_original>
